<compile_context>
chip_gen: v5e
topology: v5e:2x2
jax: 0.10.0
libtpu: 0.0.40
codegen_flags: <defaults>
</compile_context>

<pallas_src>
import jax
import jax.numpy as jnp
from jax.experimental import pallas as pl
from jax.experimental.pallas import tpu as pltpu

HIDDEN = 768  # nn.Linear(768, 768)


def _choose_tiles(M, N):
    """Pick (tm, tn) row/column tiles.

    Row tile tm: as large as possible (amortize ~0.35us per grid step) while
    keeping >= 8 row tiles (>= 4 per v7x TensorCore) so the pipeline can hide
    activation/output DMA behind the MXU.
    Column tile tn: only split N when there are too few row tiles to feed both
    v7x TensorCores / fill the pipeline; otherwise keep the full, lane-dense
    N=768 output and a fully resident weight.
    """
    if M >= 8 * 1024:
        tm = 1024
    elif M >= 8 * 512:
        tm = 512
    else:
        tm = 256
    grid_m = pl.cdiv(M, tm)

    if grid_m >= 8 or N % 256 != 0:
        tn = N                                   # resident full weight
    elif grid_m >= 4:
        tn = 384 if N % 384 == 0 else 256        # 2 column tiles
    else:
        tn = 256                                 # 3 column tiles
    return tm, tn


def _linear_kernel(x_ref, w_ref, b_ref, o_ref):
    # x_ref: (tm, K) f32 | w_ref: (K, tn) bf16 | b_ref: (1, tn) f32 | o_ref: (tm, tn) f32
    # Cast activations to bf16 in-kernel (VPU work hidden under MXU), accumulate
    # in f32 on the MXU, add f32 bias, store f32. Epilogue kept thin (v5e).
    x_bf16 = x_ref[...].astype(jnp.bfloat16)
    acc = jnp.dot(x_bf16, w_ref[...], preferred_element_type=jnp.float32)
    o_ref[...] = acc + b_ref[...]


@jax.jit
def linear_pallas(x2d, w_bf16, b):
    """x2d: [M, 768] f32, w_bf16: [768, 768] (in, out) bf16, b: [768] f32 -> [M, 768] f32."""
    M, K = x2d.shape
    N = w_bf16.shape[1]

    tm, tn = _choose_tiles(M, N)
    grid_m = pl.cdiv(M, tm)          # ragged last row block is masked by Pallas
    grid_n = N // tn

    b2d = b.reshape(1, N)

    x_spec = pl.BlockSpec((tm, K), lambda i, j: (i, 0))
    o_spec = pl.BlockSpec((tm, tn), lambda i, j: (i, j))
    if grid_n == 1:
        # Constant block index across the whole grid -> keep weight/bias
        # resident with a single buffer (no second 1.1 MB weight copy).
        w_spec = pl.BlockSpec((K, tn), lambda i, j: (0, j),
                              pipeline_mode=pl.Buffered(1))
        b_spec = pl.BlockSpec((1, tn), lambda i, j: (0, j),
                              pipeline_mode=pl.Buffered(1))
    else:
        w_spec = pl.BlockSpec((K, tn), lambda i, j: (0, j))
        b_spec = pl.BlockSpec((1, tn), lambda i, j: (0, j))

    return pl.pallas_call(
        _linear_kernel,
        out_shape=jax.ShapeDtypeStruct((M, N), jnp.float32),
        grid_spec=pltpu.PrefetchScalarGridSpec(
            num_scalar_prefetch=0,
            grid=(grid_m, grid_n),
            in_specs=[x_spec, w_spec, b_spec],
            out_specs=o_spec,
        ),
        compiler_params=pltpu.CompilerParams(
            dimension_semantics=("parallel", "parallel"),  # megacore over rows/cols
            vmem_limit_bytes=32 * 1024 * 1024,             # covers tm=1024 worst case
        ),
    )(x2d, w_bf16, b2d)


def linear_module_forward(features, params):
    """Mirrors Linear.forward: updates the dict with 'output_tokens'."""
    feat = features["token_embeddings"]  # [batch, seq, 768]
    B, S, H = feat.shape
    y2d = linear_pallas(feat.reshape(B * S, H), params["w_bf16"], params["b"])
    features = dict(features)
    features["output_tokens"] = y2d.reshape(B, S, H)
    return features


def init_params(key):
    # nn.Linear default init: U(-1/sqrt(in), 1/sqrt(in)).
    # W stored as (in, out) = weight.T so the kernel does x @ W directly.
    k_w, k_b = jax.random.split(key)
    bound = 1.0 / jnp.sqrt(jnp.float32(HIDDEN))
    w = jax.random.uniform(k_w, (HIDDEN, HIDDEN), jnp.float32, -bound, bound)
    b = jax.random.uniform(k_b, (HIDDEN,), jnp.float32, -bound, bound)
    return {"w": w, "b": b}


def prepare_params(params_f32):
    # Cast the weight to the MXU-native bf16 once at setup (not per forward call).
    return {"w_bf16": params_f32["w"].astype(jnp.bfloat16), "b": params_f32["b"]}


# TODO(synk): save/load/get_config_dict are file-I/O config plumbing, not forward ops.

if __name__ == "__main__":
    key = jax.random.PRNGKey(0)
    k_params, k_x1, k_x2 = jax.random.split(key, 3)
    params_f32 = init_params(k_params)
    params = prepare_params(params_f32)

    # Case 1: small batch*seq (M=200): exercises the ragged last row block and
    # the column-split path (grid = (1, 3), tn=256) that feeds both v7x cores.
    batch, seq = 2, 100
    token_embeddings = jax.random.normal(k_x1, (batch, seq, HIDDEN), jnp.float32)
    features = {"token_embeddings": token_embeddings}
    out = linear_module_forward(features, params)
    y = jax.block_until_ready(out["output_tokens"])

    ref = token_embeddings @ params_f32["w"] + params_f32["b"]
    assert y.shape == (batch, seq, HIDDEN)
    assert jnp.allclose(y, ref, atol=5e-2, rtol=5e-2), "mismatch vs reference (case 1)"

    # Case 2: larger batch*seq (M=2048): exercises the resident-weight path
    # (grid = (8, 1), tn=768, pl.Buffered(1) weight/bias).
    batch2, seq2 = 4, 512
    token_embeddings2 = jax.random.normal(k_x2, (batch2, seq2, HIDDEN), jnp.float32)
    out2 = linear_module_forward({"token_embeddings": token_embeddings2}, params)
    y2 = jax.block_until_ready(out2["output_tokens"])

    ref2 = token_embeddings2 @ params_f32["w"] + params_f32["b"]
    assert y2.shape == (batch2, seq2, HIDDEN)
    assert jnp.allclose(y2, ref2, atol=5e-2, rtol=5e-2), "mismatch vs reference (case 2)"

    print("KERNEL_OK")
</pallas_src>

<mosaic_0001>
module attributes {stable_mosaic.version = 11 : i64} {
  func.func @_linear_kernel(%arg0: i32, %arg1: i32, %arg2: memref<256x768xf32, #tpu.memory_space<vmem>>, %arg3: memref<768x256xbf16, #tpu.memory_space<vmem>>, %arg4: memref<1x256xf32, #tpu.memory_space<vmem>>, %arg5: memref<256x256xf32, #tpu.memory_space<vmem>>) attributes {dimension_semantics = [#tpu.dimension_semantics<parallel>, #tpu.dimension_semantics<parallel>], iteration_bounds = array<i64: 1, 3>, scalar_prefetch = 0 : i64, scratch_operands = 0 : i64, tpu.core_type = #tpu.core_type<tc>, window_params = [{transform_indices = @transform_0, window_bounds = array<i64: 256, 768>}, {transform_indices = @transform_1, window_bounds = array<i64: 768, 256>}, {transform_indices = @transform_2, window_bounds = array<i64: 1, 256>}, {transform_indices = @transform_3, window_bounds = array<i64: 256, 256>}]} {
    %c0 = arith.constant 0 : index
    %c0_0 = arith.constant 0 : index
    %0 = vector.load %arg2[%c0, %c0_0] : memref<256x768xf32, #tpu.memory_space<vmem>>, vector<256x768xf32>
    %1 = arith.truncf %0 : vector<256x768xf32> to vector<256x768xbf16>
    %c0_1 = arith.constant 0 : index
    %c0_2 = arith.constant 0 : index
    %2 = vector.load %arg3[%c0_1, %c0_2] : memref<768x256xbf16, #tpu.memory_space<vmem>>, vector<768x256xbf16>
    %cst = arith.constant dense<0.000000e+00> : vector<256x256xf32>
    %3 = tpu.matmul %1, %2, %cst {dimension_numbers = #tpu.dot_dimension_numbers<[1], [0], [0], [1], [0, 0, 1, 1], [], []>} : vector<256x768xbf16>, vector<768x256xbf16>, vector<256x256xf32> -> vector<256x256xf32>
    %c0_3 = arith.constant 0 : index
    %c0_4 = arith.constant 0 : index
    %4 = vector.load %arg4[%c0_3, %c0_4] : memref<1x256xf32, #tpu.memory_space<vmem>>, vector<1x256xf32>
    %5 = vector.broadcast %4 : vector<1x256xf32> to vector<256x256xf32>
    %6 = arith.addf %3, %5 : vector<256x256xf32>
    %c0_5 = arith.constant 0 : index
    %c0_6 = arith.constant 0 : index
    %7 = vector.load %arg5[%c0_5, %c0_6] : memref<256x256xf32, #tpu.memory_space<vmem>>, vector<256x256xf32>
    tpu.vector_store %arg5[%c0_5, %c0_6], %6 {strides = array<i32>} : memref<256x256xf32, #tpu.memory_space<vmem>>, vector<256x256xf32>,
    return
  }
  func.func @transform_0(%arg0: i32, %arg1: i32) -> (i32, i32) {
    %c0_i32 = arith.constant 0 : i32
    %c0_i32_0 = arith.constant 0 : i32
    return %arg0, %c0_i32 : i32, i32
  }
  func.func @transform_1(%arg0: i32, %arg1: i32) -> (i32, i32) {
    %c0_i32 = arith.constant 0 : i32
    %c0_i32_0 = arith.constant 0 : i32
    return %c0_i32, %arg1 : i32, i32
  }
  func.func @transform_2(%arg0: i32, %arg1: i32) -> (i32, i32) {
    %c0_i32 = arith.constant 0 : i32
    %c0_i32_0 = arith.constant 0 : i32
    return %c0_i32, %arg1 : i32, i32
  }
  func.func @transform_3(%arg0: i32, %arg1: i32) -> (i32, i32) {
    %c0_i32 = arith.constant 0 : i32
    return %arg0, %arg1 : i32, i32
  }
}

</mosaic_0001>

<llo_original>
// kernel: linear_pallas.1
$region0: #{linear_pallas.1}
  #allocation0 [shape = 'u32[]', space=smem, size = 0x4, offset = 0x4, fixed_abs, tag = 'smem constant byte address 0x4 - core index']
  #allocation1 [shape = 'u32[72,128]{1,0:T(1,128)}', space=vmem, size = 0x9000, scoped, tag = 'internal scratch']
  %s0 = inlined_call_operand.hbm [shape: f32[200,768], index: 0, kind: input, shape index: {}]
  %s1 = inlined_call_operand.hbm [shape: bf16[768,768], index: 1, kind: input, shape index: {}]
  %s2 = inlined_call_operand.vmem [shape: f32[1,768], index: 2, kind: input, shape index: {}]
  %s3 = inlined_call_operand.hbm [shape: f32[200,768], index: 3, kind: output, shape index: {}]
  %s4 = sld [smem:[#allocation0]]
  $region53: #{linear_pallas.1} parent=0
    _
  %s6 = ssub.s32 1, %s4
  %s7 = scalar_select 0, %s6, %s4
  $region1: #{linear_pallas.1} parent=0
    #allocation2 [shape = 'u8[786432]{0}', space=vmem, size = 0xc0000, scoped, tag = 'input window, operand 0, single buffered']
    #allocation3 [shape = 's32[2]{0}', space=sflag, size = 0x8, scoped, tag = 'scoped memory for linear_pallas.1']
    #allocation4 [shape = 's32[2]{0}', space=sflag, size = 0x8, scoped, tag = 'scoped memory for linear_pallas.1']
    #allocation5 [shape = 'u8[786432]{0}', space=vmem, size = 0xc0000, scoped, tag = 'input window, operand 1']
    #allocation6 [shape = 's32[2]{0}', space=sflag, size = 0x8, scoped, tag = 'scoped memory for linear_pallas.1']
    #allocation7 [shape = 'u8[524288]{0}', space=vmem, size = 0x80000, scoped, tag = 'output window, operand 0']
    %8 = vsyncpa [#allocation3], 0
    %9 = vsyncpa [#allocation6], 0
    %s10 = scalar_lea.sflag [#allocation6], 1
    %11 = vsyncpa %s10, 0
    %12 = vsyncpa [#allocation4], 0
    %s13 = scalar_lea.sflag [#allocation4], 1
    %14 = vsyncpa %s13, 0
    loop: start=0, step=1, limit=5
    $region2: #{linear_pallas.1} parent=1 // loop_pre_header
      _
    $region3: #{linear_pallas.1} parent=1 // loop_header
      %s16 = sphi 0, %s20
      %p17 = scmp.ge.s32.totalorder %s16, 5
      %s23 = sphi 0, %s35
      %s24 = sphi 0, %s31
      %s25 = sphi 0, %s23
      %s26 = sphi 0, %s24
      %s27 = sphi 0, %s25
      %s28 = sphi 0, %s26
      %s38 = sphi 0, %s40
      %s41 = sphi 0, %s38
      %s42 = sphi 0, %s41
      %s58 = sphi 0, %s42
      %s64 = sphi 0, %s66
      %s67 = sphi 0, %s64
      %s68 = sphi 0, %s67
      %s84 = sphi 0, %s68
      %s90 = sphi 0, %s92
      %s93 = sphi 0, %s90
      %s94 = sphi 0, %s93
      %s110 = sphi 0, %s94
      %s118 = sphi 0, %s120
      %s121 = sphi 0, %s118
      %s122 = sphi 0, %s121
      %s138 = sphi 0, %s122
    $region4: #{linear_pallas.1} parent=1 // loop_header_branch
      %19 = sbr.rel (%p17) target = $region8
    $region5: #{linear_pallas.1} parent=1 // loop_body
      %s21 = ssub.s32 %s16, 1
      %s22 = ssub.s32 %s16, 2
      %s29 = sadd.s32 1, %s24
      %p30 = scmp.ge.s32.totalorder %s29, 3
      %s31 = scalar_select %p30, 0, %s29
      %s32 = sadd.s32 1, %s23
      %s33 = scalar_select %p30, %s32, %s23
      %p34 = scmp.ge.s32.totalorder %s33, 1
      %s35 = scalar_select %p34, 0, %s33
      %s36 = ssub.s32 %s23, %s35
      %p37 = scmp.eq.s32.totalorder %s36, 0
      %s39 = sadd.s32 %s38, 1
      %s40 = scalar_select %p37, %s38, %s39
      %p43 = pneg %p37
      %p44 = scmp.eq.s32.totalorder %s16, 2
      %p45 = por %p43, %p44
      %p46 = scmp.ne.s32.totalorder %s38, %s41
      %p47 = scmp.eq.s32.totalorder %s16, 0
      %p48 = por %p46, %p47
      %p49 = scmp.ne.s32.totalorder %s38, %s41
      %p50 = scmp.eq.s32.totalorder %s21, 2
      %p51 = por %p49, %p50
      %p52 = scmp.ne.s32.totalorder %s41, %s42
      %p53 = scmp.eq.s32.totalorder %s21, 0
      %p54 = por %p52, %p53
      %p55 = scmp.ne.s32.totalorder %s41, %s42
      %p56 = scmp.eq.s32.totalorder %s22, 2
      %p57 = por %p55, %p56
      %p59 = scmp.ne.s32.totalorder %s42, %s58
      %p60 = scmp.eq.s32.totalorder %s22, 0
      %p61 = por %p59, %p60
      %s62 = ssub.s32 %s24, %s31
      %p63 = scmp.eq.s32.totalorder %s62, 0
      %s65 = sadd.s32 %s64, 1
      %s66 = scalar_select %p63, %s64, %s65
      %p69 = pneg %p63
      %p70 = scmp.eq.s32.totalorder %s16, 2
      %p71 = por %p69, %p70
      %p72 = scmp.ne.s32.totalorder %s64, %s67
      %p73 = scmp.eq.s32.totalorder %s16, 0
      %p74 = por %p72, %p73
      %p75 = scmp.ne.s32.totalorder %s64, %s67
      %p76 = scmp.eq.s32.totalorder %s21, 2
      %p77 = por %p75, %p76
      %p78 = scmp.ne.s32.totalorder %s67, %s68
      %p79 = scmp.eq.s32.totalorder %s21, 0
      %p80 = por %p78, %p79
      %p81 = scmp.ne.s32.totalorder %s67, %s68
      %p82 = scmp.eq.s32.totalorder %s22, 2
      %p83 = por %p81, %p82
      %p85 = scmp.ne.s32.totalorder %s68, %s84
      %p86 = scmp.eq.s32.totalorder %s22, 0
      %p87 = por %p85, %p86
      %s88 = ssub.s32 %s24, %s31
      %p89 = scmp.eq.s32.totalorder %s88, 0
      %s91 = sadd.s32 %s90, 1
      %s92 = scalar_select %p89, %s90, %s91
      %p95 = pneg %p89
      %p96 = scmp.eq.s32.totalorder %s16, 2
      %p97 = por %p95, %p96
      %p98 = scmp.ne.s32.totalorder %s90, %s93
      %p99 = scmp.eq.s32.totalorder %s16, 0
      %p100 = por %p98, %p99
      %p101 = scmp.ne.s32.totalorder %s90, %s93
      %p102 = scmp.eq.s32.totalorder %s21, 2
      %p103 = por %p101, %p102
      %p104 = scmp.ne.s32.totalorder %s93, %s94
      %p105 = scmp.eq.s32.totalorder %s21, 0
      %p106 = por %p104, %p105
      %p107 = scmp.ne.s32.totalorder %s93, %s94
      %p108 = scmp.eq.s32.totalorder %s22, 2
      %p109 = por %p107, %p108
      %p111 = scmp.ne.s32.totalorder %s94, %s110
      %p112 = scmp.eq.s32.totalorder %s22, 0
      %p113 = por %p111, %p112
      %s114 = ssub.s32 %s23, %s35
      %s115 = ssub.s32 %s24, %s31
      %s116 = sor.u32 %s114, %s115
      %p117 = scmp.eq.s32.totalorder %s116, 0
      %s119 = sadd.s32 %s118, 1
      %s120 = scalar_select %p117, %s118, %s119
      %p123 = pneg %p117
      %p124 = scmp.eq.s32.totalorder %s16, 2
      %p125 = por %p123, %p124
      %p126 = scmp.ne.s32.totalorder %s118, %s121
      %p127 = scmp.eq.s32.totalorder %s16, 0
      %p128 = por %p126, %p127
      %p129 = scmp.ne.s32.totalorder %s118, %s121
      %p130 = scmp.eq.s32.totalorder %s21, 2
      %p131 = por %p129, %p130
      %p132 = scmp.ne.s32.totalorder %s121, %s122
      %p133 = scmp.eq.s32.totalorder %s21, 0
      %p134 = por %p132, %p133
      %p135 = scmp.ne.s32.totalorder %s121, %s122
      %p136 = scmp.eq.s32.totalorder %s22, 2
      %p137 = por %p135, %p136
      %p139 = scmp.ne.s32.totalorder %s122, %s138
      %p140 = scmp.eq.s32.totalorder %s22, 0
      %p141 = por %p139, %p140
      %p142 = scmp.le.s32.totalorder 1, %s16
      %p143 = scmp.lt.s32.totalorder %s16, 4
      %p144 = pnand %p142, %p143
      %p145 = pneg %p144
      // Predicated region
      $region9: #{linear_pallas.1} parent=5 // pred_check
        _
      $region10: #{linear_pallas.1} parent=5 // pred_check_branch
        %147 = sbr.rel (%p144) target = $region12
      $region11: #{linear_pallas.1} parent=5 // pred_region
        %s148 = ssub.s32 %s16, 1
        // Predicated region
        $region13: #{linear_pallas.1} parent=11 // pred_check
          %p149 = pneg %p54
        $region14: #{linear_pallas.1} parent=11 // pred_check_branch
          %151 = sbr.rel (%p149) target = $region16
        $region15: #{linear_pallas.1} parent=11 // pred_region
          %s152 = smul.u32 32, %s25
          %s153 = ssub.s32 25, %s152
          %s154 = smul.u32 8, %s153
          %s155 = smul.u32 %s154, 6
          %s156 = ssub.s32 1536, %s155
          %s157 = sshll.u32 %s156, 4
          %158 = vsyncadd [#allocation3], %s157
          %p159 = scmp.ne.s32.totalorder 0, %s155
          %s160 = smul.addr %s152, 6
          %s161 = smul.addr %s160, 8
          %s162 = scalar_lea.hbm %s0, %s161
          %s163 = smul.u32 48, %s153
          %s164 = sshll.u32 %s162, 4
          %s165 = int_to_ptr.hbm [resolvable:$true] %s164
          %s166 = sshll.u32 [#allocation2], 4
          %s167 = int_to_ptr.vmem [resolvable:$true] %s166
          %s168 = sshll.u32 %s163, 4
          %172 = dma.hbm_to_vmem [thread:$0]  (%p159), %s165, %s168, %s167, [#allocation3], 768, 768, 48
        $region16: #{linear_pallas.1} parent=11 // pred_fallthru
          _
      $region12: #{linear_pallas.1} parent=5 // pred_fallthru
        _
      %p173 = scmp.lt.s32.totalorder %s16, 3
      // Predicated region
      $region17: #{linear_pallas.1} parent=5 // pred_check
        %p174 = pneg %p173
      $region18: #{linear_pallas.1} parent=5 // pred_check_branch
        %176 = sbr.rel (%p174) target = $region20
      $region19: #{linear_pallas.1} parent=5 // pred_region
        // Predicated region
        $region21: #{linear_pallas.1} parent=19 // pred_check
          %p177 = pneg %p74
        $region22: #{linear_pallas.1} parent=19 // pred_check_branch
          %179 = sbr.rel (%p177) target = $region24
        $region23: #{linear_pallas.1} parent=19 // pred_region
          %s180 = sand.u32 %s64, 1
          %s181 = scalar_lea.sflag [#allocation6], %s180
          %s182 = sand.u32 %s64, 1
          %s183 = smul.addr %s182, 768
          %s184 = scalar_lea.vmem [#allocation5], %s183
          %s185 = smul.u32 2, %s24
          %187 = vsyncadd %s181, 0
          %s188 = smul.addr %s185, 4
          %s189 = scalar_lea.hbm %s1, %s188
          %s190 = sshll.u32 %s189, 4
          %s191 = int_to_ptr.hbm [resolvable:$true] %s190
          %s192 = sshll.u32 %s184, 4
          %s193 = int_to_ptr.vmem [resolvable:$true] %s192
          %198 = dma.hbm_to_vmem [thread:$0]  %s191, 12288, %s193, %s181, 384, 128, 8
        $region24: #{linear_pallas.1} parent=19 // pred_fallthru
          _
        // Predicated region
        $region25: #{linear_pallas.1} parent=19 // pred_check
          %p199 = pneg %p100
        $region26: #{linear_pallas.1} parent=19 // pred_check_branch
          %201 = sbr.rel (%p199) target = $region28
        $region27: #{linear_pallas.1} parent=19 // pred_region
          %s202 = smul.u32 2, %s24
          %p203 = scmp.lt.s32.totalorder %s202, 5
          %s204 = scalar_select %p203, %s202, 5
          %s205 = scalar_lea.vmem %s2, %s204
          %s206 = smul.u32 2, %s24
        $region28: #{linear_pallas.1} parent=19 // pred_fallthru
          _
      $region20: #{linear_pallas.1} parent=5 // pred_fallthru
        _
      %p207 = scmp.le.s32.totalorder 1, %s16
      %p208 = scmp.lt.s32.totalorder %s16, 4
      %p209 = pnand %p207, %p208
      %p210 = pneg %p209
      // Predicated region
      $region29: #{linear_pallas.1} parent=5 // pred_check
        _
      $region30: #{linear_pallas.1} parent=5 // pred_check_branch
        %212 = sbr.rel (%p209) target = $region32
      $region31: #{linear_pallas.1} parent=5 // pred_region
        %s213 = ssub.s32 %s16, 1
        // Predicated region
        $region33: #{linear_pallas.1} parent=31 // pred_check
          %p214 = pneg %p54
        $region34: #{linear_pallas.1} parent=31 // pred_check_branch
          %216 = sbr.rel (%p214) target = $region36
        $region35: #{linear_pallas.1} parent=31 // pred_region
          %218 = dma.done [#allocation3], 24576
        $region36: #{linear_pallas.1} parent=31 // pred_fallthru
          _
        %s219 = sand.u32 %s67, 1
        %s220 = scalar_lea.sflag [#allocation6], %s219
        %s221 = sand.u32 %s67, 1
        %s222 = smul.addr %s221, 768
        %s223 = scalar_lea.vmem [#allocation5], %s222
        // Predicated region
        $region37: #{linear_pallas.1} parent=31 // pred_check
          %p224 = pneg %p80
        $region38: #{linear_pallas.1} parent=31 // pred_check_branch
          %226 = sbr.rel (%p224) target = $region40
        $region39: #{linear_pallas.1} parent=31 // pred_region
          %228 = dma.done %s220, 12288
        $region40: #{linear_pallas.1} parent=31 // pred_fallthru
          _
        %p229 = pneg %p54
        %p230 = pneg %p51
        %s231 = sand.u32 %s67, 1
        %s232 = scalar_lea.sflag [#allocation6], %s231
        %s233 = sand.u32 %s67, 1
        %s234 = smul.addr %s233, 768
        %s235 = scalar_lea.vmem [#allocation5], %s234
        %p236 = pneg %p80
        %p237 = pneg %p77
        %s238 = smul.u32 2, %s26
        %p239 = scmp.lt.s32.totalorder %s238, 5
        %s240 = scalar_select %p239, %s238, 5
        %s241 = scalar_lea.vmem %s2, %s240
        %p242 = pneg %p106
        %p243 = pneg %p103
        %p244 = pneg %p134
        %p245 = pneg %p131
        %s246 = sand.u32 %s121, 1
        %s247 = scalar_lea.sflag [#allocation4], %s246
        %s248 = sand.u32 %s121, 1
        %s249 = smul.addr %s248, 512
        %s250 = scalar_lea.vmem [#allocation7], %s249
        %s251 = smul.u32 32, %s25
        %s252 = ssub.s32 25, %s251
        %s253 = smul.u32 8, %s252
        %s254 = smul.u32 %s253, 6
        %s255 = smul.u32 2, %s26
        %s256 = smul.u32 2, %s26
        %p257 = scmp.lt.s32.totalorder %s256, 5
        %s258 = scalar_select %p257, %s256, 5
        %s259 = scalar_lea.vmem %s2, %s258
        %s260 = smul.u32 2, %s26
        %s261 = smul.u32 32, %s25
        %s262 = smul.u32 2, %s26
        %s263 = ssub.s32 25, %s261
        %s264 = smul.u32 8, %s263
        %s265 = smul.u32 %s264, 2
        %v266 = vld [vmem:[#allocation2] sm:$0xff]
        %v267 = vld [vmem:[#allocation2 + $0x8] sm:$0xff]
        %v268 = vld [vmem:[#allocation2 + $0x10] sm:$0xff]
        %v269 = vld [vmem:[#allocation2 + $0x18] sm:$0xff]
        %v270 = vld [vmem:[#allocation2 + $0x20] sm:$0xff]
        %v271 = vld [vmem:[#allocation2 + $0x28] sm:$0xff]
        %v272 = vld [vmem:[#allocation2 + $0x30] sm:$0xff]
        %v273 = vld [vmem:[#allocation2 + $0x38] sm:$0xff]
        %v274 = vld [vmem:[#allocation2 + $0x40] sm:$0xff]
        %v275 = vld [vmem:[#allocation2 + $0x48] sm:$0xff]
        %v276 = vld [vmem:[#allocation2 + $0x50] sm:$0xff]
        %v277 = vld [vmem:[#allocation2 + $0x58] sm:$0xff]
        %v278 = vld [vmem:[#allocation2 + $0x60] sm:$0xff]
        %v279 = vld [vmem:[#allocation2 + $0x68] sm:$0xff]
        %v280 = vld [vmem:[#allocation2 + $0x70] sm:$0xff]
        %v281 = vld [vmem:[#allocation2 + $0x78] sm:$0xff]
        %v282 = vld [vmem:[#allocation2 + $0x80] sm:$0xff]
        %v283 = vld [vmem:[#allocation2 + $0x88] sm:$0xff]
        %v284 = vld [vmem:[#allocation2 + $0x90] sm:$0xff]
        %v285 = vld [vmem:[#allocation2 + $0x98] sm:$0xff]
        %v286 = vld [vmem:[#allocation2 + $0xa0] sm:$0xff]
        %v287 = vld [vmem:[#allocation2 + $0xa8] sm:$0xff]
        %v288 = vld [vmem:[#allocation2 + $0xb0] sm:$0xff]
        %v289 = vld [vmem:[#allocation2 + $0xb8] sm:$0xff]
        %v290 = vld [vmem:[#allocation2 + $0xc0] sm:$0xff]
        %v291 = vld [vmem:[#allocation2 + $0xc8] sm:$0xff]
        %v292 = vld [vmem:[#allocation2 + $0xd0] sm:$0xff]
        %v293 = vld [vmem:[#allocation2 + $0xd8] sm:$0xff]
        %v294 = vld [vmem:[#allocation2 + $0xe0] sm:$0xff]
        %v295 = vld [vmem:[#allocation2 + $0xe8] sm:$0xff]
        %v296 = vld [vmem:[#allocation2 + $0xf0] sm:$0xff]
        %v297 = vld [vmem:[#allocation2 + $0xf8] sm:$0xff]
        %v298 = vld [vmem:[#allocation2 + $0x100] sm:$0xff]
        %v299 = vld [vmem:[#allocation2 + $0x108] sm:$0xff]
        %v300 = vld [vmem:[#allocation2 + $0x110] sm:$0xff]
        %v301 = vld [vmem:[#allocation2 + $0x118] sm:$0xff]
        %v302 = vld [vmem:[#allocation2 + $0x120] sm:$0xff]
        %v303 = vld [vmem:[#allocation2 + $0x128] sm:$0xff]
        %v304 = vld [vmem:[#allocation2 + $0x130] sm:$0xff]
        %v305 = vld [vmem:[#allocation2 + $0x138] sm:$0xff]
        %v306 = vld [vmem:[#allocation2 + $0x140] sm:$0xff]
        %v307 = vld [vmem:[#allocation2 + $0x148] sm:$0xff]
        %v308 = vld [vmem:[#allocation2 + $0x150] sm:$0xff]
        %v309 = vld [vmem:[#allocation2 + $0x158] sm:$0xff]
        %v310 = vld [vmem:[#allocation2 + $0x160] sm:$0xff]
        %v311 = vld [vmem:[#allocation2 + $0x168] sm:$0xff]
        %v312 = vld [vmem:[#allocation2 + $0x170] sm:$0xff]
        %v313 = vld [vmem:[#allocation2 + $0x178] sm:$0xff]
        %v314 = vld [vmem:[#allocation2 + $0x180] sm:$0xff]
        %v315 = vld [vmem:[#allocation2 + $0x188] sm:$0xff]
        %v316 = vld [vmem:[#allocation2 + $0x190] sm:$0xff]
        %v317 = vld [vmem:[#allocation2 + $0x198] sm:$0xff]
        %v318 = vld [vmem:[#allocation2 + $0x1a0] sm:$0xff]
        %v319 = vld [vmem:[#allocation2 + $0x1a8] sm:$0xff]
        %v320 = vld [vmem:[#allocation2 + $0x1b0] sm:$0xff]
        %v321 = vld [vmem:[#allocation2 + $0x1b8] sm:$0xff]
        %v322 = vld [vmem:[#allocation2 + $0x1c0] sm:$0xff]
        %v323 = vld [vmem:[#allocation2 + $0x1c8] sm:$0xff]
        %v324 = vld [vmem:[#allocation2 + $0x1d0] sm:$0xff]
        %v325 = vld [vmem:[#allocation2 + $0x1d8] sm:$0xff]
        %v326 = vld [vmem:[#allocation2 + $0x1e0] sm:$0xff]
        %v327 = vld [vmem:[#allocation2 + $0x1e8] sm:$0xff]
        %v328 = vld [vmem:[#allocation2 + $0x1f0] sm:$0xff]
        %v329 = vld [vmem:[#allocation2 + $0x1f8] sm:$0xff]
        %v330 = vld [vmem:[#allocation2 + $0x200] sm:$0xff]
        %v331 = vld [vmem:[#allocation2 + $0x208] sm:$0xff]
        %v332 = vld [vmem:[#allocation2 + $0x210] sm:$0xff]
        %v333 = vld [vmem:[#allocation2 + $0x218] sm:$0xff]
        %v334 = vld [vmem:[#allocation2 + $0x220] sm:$0xff]
        %v335 = vld [vmem:[#allocation2 + $0x228] sm:$0xff]
        %v336 = vld [vmem:[#allocation2 + $0x230] sm:$0xff]
        %v337 = vld [vmem:[#allocation2 + $0x238] sm:$0xff]
        %v338 = vld [vmem:[#allocation2 + $0x240] sm:$0xff]
        %v339 = vld [vmem:[#allocation2 + $0x248] sm:$0xff]
        %v340 = vld [vmem:[#allocation2 + $0x250] sm:$0xff]
        %v341 = vld [vmem:[#allocation2 + $0x258] sm:$0xff]
        %v342 = vld [vmem:[#allocation2 + $0x260] sm:$0xff]
        %v343 = vld [vmem:[#allocation2 + $0x268] sm:$0xff]
        %v344 = vld [vmem:[#allocation2 + $0x270] sm:$0xff]
        %v345 = vld [vmem:[#allocation2 + $0x278] sm:$0xff]
        %v346 = vld [vmem:[#allocation2 + $0x280] sm:$0xff]
        %v347 = vld [vmem:[#allocation2 + $0x288] sm:$0xff]
        %v348 = vld [vmem:[#allocation2 + $0x290] sm:$0xff]
        %v349 = vld [vmem:[#allocation2 + $0x298] sm:$0xff]
        %v350 = vld [vmem:[#allocation2 + $0x2a0] sm:$0xff]
        %v351 = vld [vmem:[#allocation2 + $0x2a8] sm:$0xff]
        %v352 = vld [vmem:[#allocation2 + $0x2b0] sm:$0xff]
        %v353 = vld [vmem:[#allocation2 + $0x2b8] sm:$0xff]
        %v354 = vld [vmem:[#allocation2 + $0x2c0] sm:$0xff]
        %v355 = vld [vmem:[#allocation2 + $0x2c8] sm:$0xff]
        %v356 = vld [vmem:[#allocation2 + $0x2d0] sm:$0xff]
        %v357 = vld [vmem:[#allocation2 + $0x2d8] sm:$0xff]
        %v358 = vld [vmem:[#allocation2 + $0x2e0] sm:$0xff]
        %v359 = vld [vmem:[#allocation2 + $0x2e8] sm:$0xff]
        %v360 = vld [vmem:[#allocation2 + $0x2f0] sm:$0xff]
        %v361 = vld [vmem:[#allocation2 + $0x2f8] sm:$0xff]
        %v362 = vld [vmem:[#allocation2 + $0x300] sm:$0xff]
        %v363 = vld [vmem:[#allocation2 + $0x308] sm:$0xff]
        %v364 = vld [vmem:[#allocation2 + $0x310] sm:$0xff]
        %v365 = vld [vmem:[#allocation2 + $0x318] sm:$0xff]
        %v366 = vld [vmem:[#allocation2 + $0x320] sm:$0xff]
        %v367 = vld [vmem:[#allocation2 + $0x328] sm:$0xff]
        %v368 = vld [vmem:[#allocation2 + $0x330] sm:$0xff]
        %v369 = vld [vmem:[#allocation2 + $0x338] sm:$0xff]
        %v370 = vld [vmem:[#allocation2 + $0x340] sm:$0xff]
        %v371 = vld [vmem:[#allocation2 + $0x348] sm:$0xff]
        %v372 = vld [vmem:[#allocation2 + $0x350] sm:$0xff]
        %v373 = vld [vmem:[#allocation2 + $0x358] sm:$0xff]
        %v374 = vld [vmem:[#allocation2 + $0x360] sm:$0xff]
        %v375 = vld [vmem:[#allocation2 + $0x368] sm:$0xff]
        %v376 = vld [vmem:[#allocation2 + $0x370] sm:$0xff]
        %v377 = vld [vmem:[#allocation2 + $0x378] sm:$0xff]
        %v378 = vld [vmem:[#allocation2 + $0x380] sm:$0xff]
        %v379 = vld [vmem:[#allocation2 + $0x388] sm:$0xff]
        %v380 = vld [vmem:[#allocation2 + $0x390] sm:$0xff]
        %v381 = vld [vmem:[#allocation2 + $0x398] sm:$0xff]
        %v382 = vld [vmem:[#allocation2 + $0x3a0] sm:$0xff]
        %v383 = vld [vmem:[#allocation2 + $0x3a8] sm:$0xff]
        %v384 = vld [vmem:[#allocation2 + $0x3b0] sm:$0xff]
        %v385 = vld [vmem:[#allocation2 + $0x3b8] sm:$0xff]
        %v386 = vld [vmem:[#allocation2 + $0x3c0] sm:$0xff]
        %v387 = vld [vmem:[#allocation2 + $0x3c8] sm:$0xff]
        %v388 = vld [vmem:[#allocation2 + $0x3d0] sm:$0xff]
        %v389 = vld [vmem:[#allocation2 + $0x3d8] sm:$0xff]
        %v390 = vld [vmem:[#allocation2 + $0x3e0] sm:$0xff]
        %v391 = vld [vmem:[#allocation2 + $0x3e8] sm:$0xff]
        %v392 = vld [vmem:[#allocation2 + $0x3f0] sm:$0xff]
        %v393 = vld [vmem:[#allocation2 + $0x3f8] sm:$0xff]
        %v394 = vld [vmem:[#allocation2 + $0x400] sm:$0xff]
        %v395 = vld [vmem:[#allocation2 + $0x408] sm:$0xff]
        %v396 = vld [vmem:[#allocation2 + $0x410] sm:$0xff]
        %v397 = vld [vmem:[#allocation2 + $0x418] sm:$0xff]
        %v398 = vld [vmem:[#allocation2 + $0x420] sm:$0xff]
        %v399 = vld [vmem:[#allocation2 + $0x428] sm:$0xff]
        %v400 = vld [vmem:[#allocation2 + $0x430] sm:$0xff]
        %v401 = vld [vmem:[#allocation2 + $0x438] sm:$0xff]
        %v402 = vld [vmem:[#allocation2 + $0x440] sm:$0xff]
        %v403 = vld [vmem:[#allocation2 + $0x448] sm:$0xff]
        %v404 = vld [vmem:[#allocation2 + $0x450] sm:$0xff]
        %v405 = vld [vmem:[#allocation2 + $0x458] sm:$0xff]
        %v406 = vld [vmem:[#allocation2 + $0x460] sm:$0xff]
        %v407 = vld [vmem:[#allocation2 + $0x468] sm:$0xff]
        %v408 = vld [vmem:[#allocation2 + $0x470] sm:$0xff]
        %v409 = vld [vmem:[#allocation2 + $0x478] sm:$0xff]
        %v410 = vld [vmem:[#allocation2 + $0x480] sm:$0xff]
        %v411 = vld [vmem:[#allocation2 + $0x488] sm:$0xff]
        %v412 = vld [vmem:[#allocation2 + $0x490] sm:$0xff]
        %v413 = vld [vmem:[#allocation2 + $0x498] sm:$0xff]
        %v414 = vld [vmem:[#allocation2 + $0x4a0] sm:$0xff]
        %v415 = vld [vmem:[#allocation2 + $0x4a8] sm:$0xff]
        %v416 = vld [vmem:[#allocation2 + $0x4b0] sm:$0xff]
        %v417 = vld [vmem:[#allocation2 + $0x4b8] sm:$0xff]
        %v418 = vld [vmem:[#allocation2 + $0x4c0] sm:$0xff]
        %v419 = vld [vmem:[#allocation2 + $0x4c8] sm:$0xff]
        %v420 = vld [vmem:[#allocation2 + $0x4d0] sm:$0xff]
        %v421 = vld [vmem:[#allocation2 + $0x4d8] sm:$0xff]
        %v422 = vld [vmem:[#allocation2 + $0x4e0] sm:$0xff]
        %v423 = vld [vmem:[#allocation2 + $0x4e8] sm:$0xff]
        %v424 = vld [vmem:[#allocation2 + $0x4f0] sm:$0xff]
        %v425 = vld [vmem:[#allocation2 + $0x4f8] sm:$0xff]
        %v426 = vld [vmem:[#allocation2 + $0x500] sm:$0xff]
        %v427 = vld [vmem:[#allocation2 + $0x508] sm:$0xff]
        %v428 = vld [vmem:[#allocation2 + $0x510] sm:$0xff]
        %v429 = vld [vmem:[#allocation2 + $0x518] sm:$0xff]
        %v430 = vld [vmem:[#allocation2 + $0x520] sm:$0xff]
        %v431 = vld [vmem:[#allocation2 + $0x528] sm:$0xff]
        %v432 = vld [vmem:[#allocation2 + $0x530] sm:$0xff]
        %v433 = vld [vmem:[#allocation2 + $0x538] sm:$0xff]
        %v434 = vld [vmem:[#allocation2 + $0x540] sm:$0xff]
        %v435 = vld [vmem:[#allocation2 + $0x548] sm:$0xff]
        %v436 = vld [vmem:[#allocation2 + $0x550] sm:$0xff]
        %v437 = vld [vmem:[#allocation2 + $0x558] sm:$0xff]
        %v438 = vld [vmem:[#allocation2 + $0x560] sm:$0xff]
        %v439 = vld [vmem:[#allocation2 + $0x568] sm:$0xff]
        %v440 = vld [vmem:[#allocation2 + $0x570] sm:$0xff]
        %v441 = vld [vmem:[#allocation2 + $0x578] sm:$0xff]
        %v442 = vld [vmem:[#allocation2 + $0x580] sm:$0xff]
        %v443 = vld [vmem:[#allocation2 + $0x588] sm:$0xff]
        %v444 = vld [vmem:[#allocation2 + $0x590] sm:$0xff]
        %v445 = vld [vmem:[#allocation2 + $0x598] sm:$0xff]
        %v446 = vld [vmem:[#allocation2 + $0x5a0] sm:$0xff]
        %v447 = vld [vmem:[#allocation2 + $0x5a8] sm:$0xff]
        %v448 = vld [vmem:[#allocation2 + $0x5b0] sm:$0xff]
        %v449 = vld [vmem:[#allocation2 + $0x5b8] sm:$0xff]
        %v450 = vld [vmem:[#allocation2 + $0x5c0] sm:$0xff]
        %v451 = vld [vmem:[#allocation2 + $0x5c8] sm:$0xff]
        %v452 = vld [vmem:[#allocation2 + $0x5d0] sm:$0xff]
        %v453 = vld [vmem:[#allocation2 + $0x5d8] sm:$0xff]
        %v454 = vld [vmem:[#allocation2 + $0x5e0] sm:$0xff]
        %v455 = vld [vmem:[#allocation2 + $0x5e8] sm:$0xff]
        %v456 = vld [vmem:[#allocation2 + $0x5f0] sm:$0xff]
        %v457 = vld [vmem:[#allocation2 + $0x5f8] sm:$0xff]
        %v458 = vpack.c.bf16 %v272, %v266
        %v459 = vpack.c.bf16 %v273, %v267
        %v460 = vpack.c.bf16 %v274, %v268
        %v461 = vpack.c.bf16 %v275, %v269
        %v462 = vpack.c.bf16 %v276, %v270
        %v463 = vpack.c.bf16 %v277, %v271
        %v464 = vpack.c.bf16 %v284, %v278
        %v465 = vpack.c.bf16 %v285, %v279
        %v466 = vpack.c.bf16 %v286, %v280
        %v467 = vpack.c.bf16 %v287, %v281
        %v468 = vpack.c.bf16 %v288, %v282
        %v469 = vpack.c.bf16 %v289, %v283
        %v470 = vpack.c.bf16 %v296, %v290
        %v471 = vpack.c.bf16 %v297, %v291
        %v472 = vpack.c.bf16 %v298, %v292
        %v473 = vpack.c.bf16 %v299, %v293
        %v474 = vpack.c.bf16 %v300, %v294
        %v475 = vpack.c.bf16 %v301, %v295
        %v476 = vpack.c.bf16 %v308, %v302
        %v477 = vpack.c.bf16 %v309, %v303
        %v478 = vpack.c.bf16 %v310, %v304
        %v479 = vpack.c.bf16 %v311, %v305
        %v480 = vpack.c.bf16 %v312, %v306
        %v481 = vpack.c.bf16 %v313, %v307
        %v482 = vpack.c.bf16 %v320, %v314
        %v483 = vpack.c.bf16 %v321, %v315
        %v484 = vpack.c.bf16 %v322, %v316
        %v485 = vpack.c.bf16 %v323, %v317
        %v486 = vpack.c.bf16 %v324, %v318
        %v487 = vpack.c.bf16 %v325, %v319
        %v488 = vpack.c.bf16 %v332, %v326
        %v489 = vpack.c.bf16 %v333, %v327
        %v490 = vpack.c.bf16 %v334, %v328
        %v491 = vpack.c.bf16 %v335, %v329
        %v492 = vpack.c.bf16 %v336, %v330
        %v493 = vpack.c.bf16 %v337, %v331
        %v494 = vpack.c.bf16 %v344, %v338
        %v495 = vpack.c.bf16 %v345, %v339
        %v496 = vpack.c.bf16 %v346, %v340
        %v497 = vpack.c.bf16 %v347, %v341
        %v498 = vpack.c.bf16 %v348, %v342
        %v499 = vpack.c.bf16 %v349, %v343
        %v500 = vpack.c.bf16 %v356, %v350
        %v501 = vpack.c.bf16 %v357, %v351
        %v502 = vpack.c.bf16 %v358, %v352
        %v503 = vpack.c.bf16 %v359, %v353
        %v504 = vpack.c.bf16 %v360, %v354
        %v505 = vpack.c.bf16 %v361, %v355
        %v506 = vpack.c.bf16 %v368, %v362
        %v507 = vpack.c.bf16 %v369, %v363
        %v508 = vpack.c.bf16 %v370, %v364
        %v509 = vpack.c.bf16 %v371, %v365
        %v510 = vpack.c.bf16 %v372, %v366
        %v511 = vpack.c.bf16 %v373, %v367
        %v512 = vpack.c.bf16 %v380, %v374
        %v513 = vpack.c.bf16 %v381, %v375
        %v514 = vpack.c.bf16 %v382, %v376
        %v515 = vpack.c.bf16 %v383, %v377
        %v516 = vpack.c.bf16 %v384, %v378
        %v517 = vpack.c.bf16 %v385, %v379
        %v518 = vpack.c.bf16 %v392, %v386
        %v519 = vpack.c.bf16 %v393, %v387
        %v520 = vpack.c.bf16 %v394, %v388
        %v521 = vpack.c.bf16 %v395, %v389
        %v522 = vpack.c.bf16 %v396, %v390
        %v523 = vpack.c.bf16 %v397, %v391
        %v524 = vpack.c.bf16 %v404, %v398
        %v525 = vpack.c.bf16 %v405, %v399
        %v526 = vpack.c.bf16 %v406, %v400
        %v527 = vpack.c.bf16 %v407, %v401
        %v528 = vpack.c.bf16 %v408, %v402
        %v529 = vpack.c.bf16 %v409, %v403
        %v530 = vpack.c.bf16 %v416, %v410
        %v531 = vpack.c.bf16 %v417, %v411
        %v532 = vpack.c.bf16 %v418, %v412
        %v533 = vpack.c.bf16 %v419, %v413
        %v534 = vpack.c.bf16 %v420, %v414
        %v535 = vpack.c.bf16 %v421, %v415
        %v536 = vpack.c.bf16 %v428, %v422
        %v537 = vpack.c.bf16 %v429, %v423
        %v538 = vpack.c.bf16 %v430, %v424
        %v539 = vpack.c.bf16 %v431, %v425
        %v540 = vpack.c.bf16 %v432, %v426
        %v541 = vpack.c.bf16 %v433, %v427
        %v542 = vpack.c.bf16 %v440, %v434
        %v543 = vpack.c.bf16 %v441, %v435
        %v544 = vpack.c.bf16 %v442, %v436
        %v545 = vpack.c.bf16 %v443, %v437
        %v546 = vpack.c.bf16 %v444, %v438
        %v547 = vpack.c.bf16 %v445, %v439
        %v548 = vpack.c.bf16 %v452, %v446
        %v549 = vpack.c.bf16 %v453, %v447
        %v550 = vpack.c.bf16 %v454, %v448
        %v551 = vpack.c.bf16 %v455, %v449
        %v552 = vpack.c.bf16 %v456, %v450
        %v553 = vpack.c.bf16 %v457, %v451
        %v554 = vld [vmem:[%s223] sm:$0xff]
        %v555 = vld [vmem:[%s223 + $0x8] sm:$0xff]
        %v556 = vld [vmem:[%s223 + $0x10] sm:$0xff]
        %v557 = vld [vmem:[%s223 + $0x18] sm:$0xff]
        %v558 = vld [vmem:[%s223 + $0x20] sm:$0xff]
        %v559 = vld [vmem:[%s223 + $0x28] sm:$0xff]
        %v560 = vld [vmem:[%s223 + $0x30] sm:$0xff]
        %v561 = vld [vmem:[%s223 + $0x38] sm:$0xff]
        %v562 = vld [vmem:[%s223 + $0x40] sm:$0xff]
        %v563 = vld [vmem:[%s223 + $0x48] sm:$0xff]
        %v564 = vld [vmem:[%s223 + $0x50] sm:$0xff]
        %v565 = vld [vmem:[%s223 + $0x58] sm:$0xff]
        %v566 = vld [vmem:[%s223 + $0x60] sm:$0xff]
        %v567 = vld [vmem:[%s223 + $0x68] sm:$0xff]
        %v568 = vld [vmem:[%s223 + $0x70] sm:$0xff]
        %v569 = vld [vmem:[%s223 + $0x78] sm:$0xff]
        %v570 = vld [vmem:[%s223 + $0x80] sm:$0xff]
        %v571 = vld [vmem:[%s223 + $0x88] sm:$0xff]
        %v572 = vld [vmem:[%s223 + $0x90] sm:$0xff]
        %v573 = vld [vmem:[%s223 + $0x98] sm:$0xff]
        %v574 = vld [vmem:[%s223 + $0xa0] sm:$0xff]
        %v575 = vld [vmem:[%s223 + $0xa8] sm:$0xff]
        %v576 = vld [vmem:[%s223 + $0xb0] sm:$0xff]
        %v577 = vld [vmem:[%s223 + $0xb8] sm:$0xff]
        %v578 = vld [vmem:[%s223 + $0xc0] sm:$0xff]
        %v579 = vld [vmem:[%s223 + $0xc8] sm:$0xff]
        %v580 = vld [vmem:[%s223 + $0xd0] sm:$0xff]
        %v581 = vld [vmem:[%s223 + $0xd8] sm:$0xff]
        %v582 = vld [vmem:[%s223 + $0xe0] sm:$0xff]
        %v583 = vld [vmem:[%s223 + $0xe8] sm:$0xff]
        %v584 = vld [vmem:[%s223 + $0xf0] sm:$0xff]
        %v585 = vld [vmem:[%s223 + $0xf8] sm:$0xff]
        %v586 = vld [vmem:[%s223 + $0x100] sm:$0xff]
        %v587 = vld [vmem:[%s223 + $0x108] sm:$0xff]
        %v588 = vld [vmem:[%s223 + $0x110] sm:$0xff]
        %v589 = vld [vmem:[%s223 + $0x118] sm:$0xff]
        %v590 = vld [vmem:[%s223 + $0x120] sm:$0xff]
        %v591 = vld [vmem:[%s223 + $0x128] sm:$0xff]
        %v592 = vld [vmem:[%s223 + $0x130] sm:$0xff]
        %v593 = vld [vmem:[%s223 + $0x138] sm:$0xff]
        %v594 = vld [vmem:[%s223 + $0x140] sm:$0xff]
        %v595 = vld [vmem:[%s223 + $0x148] sm:$0xff]
        %v596 = vld [vmem:[%s223 + $0x150] sm:$0xff]
        %v597 = vld [vmem:[%s223 + $0x158] sm:$0xff]
        %v598 = vld [vmem:[%s223 + $0x160] sm:$0xff]
        %v599 = vld [vmem:[%s223 + $0x168] sm:$0xff]
        %v600 = vld [vmem:[%s223 + $0x170] sm:$0xff]
        %v601 = vld [vmem:[%s223 + $0x178] sm:$0xff]
        %v602 = vld [vmem:[%s223 + $0x180] sm:$0xff]
        %v603 = vld [vmem:[%s223 + $0x188] sm:$0xff]
        %v604 = vld [vmem:[%s223 + $0x190] sm:$0xff]
        %v605 = vld [vmem:[%s223 + $0x198] sm:$0xff]
        %v606 = vld [vmem:[%s223 + $0x1a0] sm:$0xff]
        %v607 = vld [vmem:[%s223 + $0x1a8] sm:$0xff]
        %v608 = vld [vmem:[%s223 + $0x1b0] sm:$0xff]
        %v609 = vld [vmem:[%s223 + $0x1b8] sm:$0xff]
        %v610 = vld [vmem:[%s223 + $0x1c0] sm:$0xff]
        %v611 = vld [vmem:[%s223 + $0x1c8] sm:$0xff]
        %v612 = vld [vmem:[%s223 + $0x1d0] sm:$0xff]
        %v613 = vld [vmem:[%s223 + $0x1d8] sm:$0xff]
        %v614 = vld [vmem:[%s223 + $0x1e0] sm:$0xff]
        %v615 = vld [vmem:[%s223 + $0x1e8] sm:$0xff]
        %v616 = vld [vmem:[%s223 + $0x1f0] sm:$0xff]
        %v617 = vld [vmem:[%s223 + $0x1f8] sm:$0xff]
        %v618 = vld [vmem:[%s223 + $0x200] sm:$0xff]
        %v619 = vld [vmem:[%s223 + $0x208] sm:$0xff]
        %v620 = vld [vmem:[%s223 + $0x210] sm:$0xff]
        %v621 = vld [vmem:[%s223 + $0x218] sm:$0xff]
        %v622 = vld [vmem:[%s223 + $0x220] sm:$0xff]
        %v623 = vld [vmem:[%s223 + $0x228] sm:$0xff]
        %v624 = vld [vmem:[%s223 + $0x230] sm:$0xff]
        %v625 = vld [vmem:[%s223 + $0x238] sm:$0xff]
        %v626 = vld [vmem:[%s223 + $0x240] sm:$0xff]
        %v627 = vld [vmem:[%s223 + $0x248] sm:$0xff]
        %v628 = vld [vmem:[%s223 + $0x250] sm:$0xff]
        %v629 = vld [vmem:[%s223 + $0x258] sm:$0xff]
        %v630 = vld [vmem:[%s223 + $0x260] sm:$0xff]
        %v631 = vld [vmem:[%s223 + $0x268] sm:$0xff]
        %v632 = vld [vmem:[%s223 + $0x270] sm:$0xff]
        %v633 = vld [vmem:[%s223 + $0x278] sm:$0xff]
        %v634 = vld [vmem:[%s223 + $0x280] sm:$0xff]
        %v635 = vld [vmem:[%s223 + $0x288] sm:$0xff]
        %v636 = vld [vmem:[%s223 + $0x290] sm:$0xff]
        %v637 = vld [vmem:[%s223 + $0x298] sm:$0xff]
        %v638 = vld [vmem:[%s223 + $0x2a0] sm:$0xff]
        %v639 = vld [vmem:[%s223 + $0x2a8] sm:$0xff]
        %v640 = vld [vmem:[%s223 + $0x2b0] sm:$0xff]
        %v641 = vld [vmem:[%s223 + $0x2b8] sm:$0xff]
        %v642 = vld [vmem:[%s223 + $0x2c0] sm:$0xff]
        %v643 = vld [vmem:[%s223 + $0x2c8] sm:$0xff]
        %v644 = vld [vmem:[%s223 + $0x2d0] sm:$0xff]
        %v645 = vld [vmem:[%s223 + $0x2d8] sm:$0xff]
        %v646 = vld [vmem:[%s223 + $0x2e0] sm:$0xff]
        %v647 = vld [vmem:[%s223 + $0x2e8] sm:$0xff]
        %v648 = vld [vmem:[%s223 + $0x2f0] sm:$0xff]
        %v649 = vld [vmem:[%s223 + $0x2f8] sm:$0xff]
        %v650 = vld [vmem:[%s259] sm:$0x3]
        %v652 = vperm.slane %v650, 0
        %v653 = vperm.slane %v650, 1
        %v752 = vunpack.c.l.b16 %v554
        %v753 = vunpack.c.h.b16 %v554
        %v754 = vunpack.c.l.b16 %v555
        %v755 = vunpack.c.h.b16 %v555
        %v756 = vunpack.c.l.b16 %v556
        %v757 = vunpack.c.h.b16 %v556
        %v758 = vunpack.c.l.b16 %v557
        %v759 = vunpack.c.h.b16 %v557
        %v760 = vunpack.c.l.b16 %v558
        %v761 = vunpack.c.h.b16 %v558
        %v762 = vunpack.c.l.b16 %v559
        %v763 = vunpack.c.h.b16 %v559
        %v764 = vunpack.c.l.b16 %v560
        %v765 = vunpack.c.h.b16 %v560
        %v766 = vunpack.c.l.b16 %v561
        %v767 = vunpack.c.h.b16 %v561
        %v768 = vunpack.c.l.b16 %v562
        %v769 = vunpack.c.h.b16 %v562
        %v770 = vunpack.c.l.b16 %v563
        %v771 = vunpack.c.h.b16 %v563
        %v772 = vunpack.c.l.b16 %v564
        %v773 = vunpack.c.h.b16 %v564
        %v774 = vunpack.c.l.b16 %v565
        %v775 = vunpack.c.h.b16 %v565
        %v776 = vunpack.c.l.b16 %v566
        %v777 = vunpack.c.h.b16 %v566
        %v778 = vunpack.c.l.b16 %v567
        %v779 = vunpack.c.h.b16 %v567
        %v780 = vunpack.c.l.b16 %v568
        %v781 = vunpack.c.h.b16 %v568
        %v782 = vunpack.c.l.b16 %v569
        %v783 = vunpack.c.h.b16 %v569
        %v784 = vunpack.c.l.b16 %v570
        %v785 = vunpack.c.h.b16 %v570
        %v786 = vunpack.c.l.b16 %v571
        %v787 = vunpack.c.h.b16 %v571
        %v788 = vunpack.c.l.b16 %v572
        %v789 = vunpack.c.h.b16 %v572
        %v790 = vunpack.c.l.b16 %v573
        %v791 = vunpack.c.h.b16 %v573
        %v792 = vunpack.c.l.b16 %v574
        %v793 = vunpack.c.h.b16 %v574
        %v794 = vunpack.c.l.b16 %v575
        %v795 = vunpack.c.h.b16 %v575
        %v796 = vunpack.c.l.b16 %v576
        %v797 = vunpack.c.h.b16 %v576
        %v798 = vunpack.c.l.b16 %v577
        %v799 = vunpack.c.h.b16 %v577
        %v800 = vunpack.c.l.b16 %v578
        %v801 = vunpack.c.h.b16 %v578
        %v802 = vunpack.c.l.b16 %v579
        %v803 = vunpack.c.h.b16 %v579
        %v804 = vunpack.c.l.b16 %v580
        %v805 = vunpack.c.h.b16 %v580
        %v806 = vunpack.c.l.b16 %v581
        %v807 = vunpack.c.h.b16 %v581
        %v808 = vunpack.c.l.b16 %v582
        %v809 = vunpack.c.h.b16 %v582
        %v810 = vunpack.c.l.b16 %v583
        %v811 = vunpack.c.h.b16 %v583
        %v812 = vunpack.c.l.b16 %v584
        %v813 = vunpack.c.h.b16 %v584
        %v814 = vunpack.c.l.b16 %v585
        %v815 = vunpack.c.h.b16 %v585
        %v816 = vunpack.c.l.b16 %v586
        %v817 = vunpack.c.h.b16 %v586
        %v818 = vunpack.c.l.b16 %v587
        %v819 = vunpack.c.h.b16 %v587
        %v820 = vunpack.c.l.b16 %v588
        %v821 = vunpack.c.h.b16 %v588
        %v822 = vunpack.c.l.b16 %v589
        %v823 = vunpack.c.h.b16 %v589
        %v824 = vunpack.c.l.b16 %v590
        %v825 = vunpack.c.h.b16 %v590
        %v826 = vunpack.c.l.b16 %v591
        %v827 = vunpack.c.h.b16 %v591
        %v828 = vunpack.c.l.b16 %v592
        %v829 = vunpack.c.h.b16 %v592
        %v830 = vunpack.c.l.b16 %v593
        %v831 = vunpack.c.h.b16 %v593
        %v832 = vunpack.c.l.b16 %v594
        %v833 = vunpack.c.h.b16 %v594
        %v834 = vunpack.c.l.b16 %v595
        %v835 = vunpack.c.h.b16 %v595
        %v836 = vunpack.c.l.b16 %v596
        %v837 = vunpack.c.h.b16 %v596
        %v838 = vunpack.c.l.b16 %v597
        %v839 = vunpack.c.h.b16 %v597
        %v840 = vunpack.c.l.b16 %v598
        %v841 = vunpack.c.h.b16 %v598
        %v842 = vunpack.c.l.b16 %v599
        %v843 = vunpack.c.h.b16 %v599
        %v844 = vunpack.c.l.b16 %v600
        %v845 = vunpack.c.h.b16 %v600
        %v846 = vunpack.c.l.b16 %v601
        %v847 = vunpack.c.h.b16 %v601
        %v848 = vunpack.c.l.b16 %v602
        %v849 = vunpack.c.h.b16 %v602
        %v850 = vunpack.c.l.b16 %v603
        %v851 = vunpack.c.h.b16 %v603
        %v852 = vunpack.c.l.b16 %v604
        %v853 = vunpack.c.h.b16 %v604
        %v854 = vunpack.c.l.b16 %v605
        %v855 = vunpack.c.h.b16 %v605
        %v856 = vunpack.c.l.b16 %v606
        %v857 = vunpack.c.h.b16 %v606
        %v858 = vunpack.c.l.b16 %v607
        %v859 = vunpack.c.h.b16 %v607
        %v860 = vunpack.c.l.b16 %v608
        %v861 = vunpack.c.h.b16 %v608
        %v862 = vunpack.c.l.b16 %v609
        %v863 = vunpack.c.h.b16 %v609
        %v864 = vunpack.c.l.b16 %v610
        %v865 = vunpack.c.h.b16 %v610
        %v866 = vunpack.c.l.b16 %v611
        %v867 = vunpack.c.h.b16 %v611
        %v868 = vunpack.c.l.b16 %v612
        %v869 = vunpack.c.h.b16 %v612
        %v870 = vunpack.c.l.b16 %v613
        %v871 = vunpack.c.h.b16 %v613
        %v872 = vunpack.c.l.b16 %v614
        %v873 = vunpack.c.h.b16 %v614
        %v874 = vunpack.c.l.b16 %v615
        %v875 = vunpack.c.h.b16 %v615
        %v876 = vunpack.c.l.b16 %v616
        %v877 = vunpack.c.h.b16 %v616
        %v878 = vunpack.c.l.b16 %v617
        %v879 = vunpack.c.h.b16 %v617
        %v880 = vunpack.c.l.b16 %v618
        %v881 = vunpack.c.h.b16 %v618
        %v882 = vunpack.c.l.b16 %v619
        %v883 = vunpack.c.h.b16 %v619
        %v884 = vunpack.c.l.b16 %v620
        %v885 = vunpack.c.h.b16 %v620
        %v886 = vunpack.c.l.b16 %v621
        %v887 = vunpack.c.h.b16 %v621
        %v888 = vunpack.c.l.b16 %v622
        %v889 = vunpack.c.h.b16 %v622
        %v890 = vunpack.c.l.b16 %v623
        %v891 = vunpack.c.h.b16 %v623
        %v892 = vunpack.c.l.b16 %v624
        %v893 = vunpack.c.h.b16 %v624
        %v894 = vunpack.c.l.b16 %v625
        %v895 = vunpack.c.h.b16 %v625
        %v896 = vunpack.c.l.b16 %v626
        %v897 = vunpack.c.h.b16 %v626
        %v898 = vunpack.c.l.b16 %v627
        %v899 = vunpack.c.h.b16 %v627
        %v900 = vunpack.c.l.b16 %v628
        %v901 = vunpack.c.h.b16 %v628
        %v902 = vunpack.c.l.b16 %v629
        %v903 = vunpack.c.h.b16 %v629
        %v904 = vunpack.c.l.b16 %v630
        %v905 = vunpack.c.h.b16 %v630
        %v906 = vunpack.c.l.b16 %v631
        %v907 = vunpack.c.h.b16 %v631
        %v908 = vunpack.c.l.b16 %v632
        %v909 = vunpack.c.h.b16 %v632
        %v910 = vunpack.c.l.b16 %v633
        %v911 = vunpack.c.h.b16 %v633
        %v912 = vunpack.c.l.b16 %v634
        %v913 = vunpack.c.h.b16 %v634
        %v914 = vunpack.c.l.b16 %v635
        %v915 = vunpack.c.h.b16 %v635
        %v916 = vunpack.c.l.b16 %v636
        %v917 = vunpack.c.h.b16 %v636
        %v918 = vunpack.c.l.b16 %v637
        %v919 = vunpack.c.h.b16 %v637
        %v920 = vunpack.c.l.b16 %v638
        %v921 = vunpack.c.h.b16 %v638
        %v922 = vunpack.c.l.b16 %v639
        %v923 = vunpack.c.h.b16 %v639
        %v924 = vunpack.c.l.b16 %v640
        %v925 = vunpack.c.h.b16 %v640
        %v926 = vunpack.c.l.b16 %v641
        %v927 = vunpack.c.h.b16 %v641
        %v928 = vunpack.c.l.b16 %v642
        %v929 = vunpack.c.h.b16 %v642
        %v930 = vunpack.c.l.b16 %v643
        %v931 = vunpack.c.h.b16 %v643
        %v932 = vunpack.c.l.b16 %v644
        %v933 = vunpack.c.h.b16 %v644
        %v934 = vunpack.c.l.b16 %v645
        %v935 = vunpack.c.h.b16 %v645
        %v936 = vunpack.c.l.b16 %v646
        %v937 = vunpack.c.h.b16 %v646
        %v938 = vunpack.c.l.b16 %v647
        %v939 = vunpack.c.h.b16 %v647
        %v940 = vunpack.c.l.b16 %v648
        %v941 = vunpack.c.h.b16 %v648
        %v942 = vunpack.c.l.b16 %v649
        %v943 = vunpack.c.h.b16 %v649
        %v944 = vpack.c.b16 %v754, %v752
        %v945 = vpack.c.b16 %v755, %v753
        %v946 = vpack.c.b16 %v758, %v756
        %v947 = vpack.c.b16 %v759, %v757
        %v948 = vpack.c.b16 %v762, %v760
        %v949 = vpack.c.b16 %v763, %v761
        %v950 = vpack.c.b16 %v766, %v764
        %v951 = vpack.c.b16 %v767, %v765
        %v952 = vpack.c.b16 %v770, %v768
        %v953 = vpack.c.b16 %v771, %v769
        %v954 = vpack.c.b16 %v774, %v772
        %v955 = vpack.c.b16 %v775, %v773
        %v956 = vpack.c.b16 %v778, %v776
        %v957 = vpack.c.b16 %v779, %v777
        %v958 = vpack.c.b16 %v782, %v780
        %v959 = vpack.c.b16 %v783, %v781
        %v960 = vpack.c.b16 %v786, %v784
        %v961 = vpack.c.b16 %v787, %v785
        %v962 = vpack.c.b16 %v790, %v788
        %v963 = vpack.c.b16 %v791, %v789
        %v964 = vpack.c.b16 %v794, %v792
        %v965 = vpack.c.b16 %v795, %v793
        %v966 = vpack.c.b16 %v798, %v796
        %v967 = vpack.c.b16 %v799, %v797
        %v968 = vpack.c.b16 %v802, %v800
        %v969 = vpack.c.b16 %v803, %v801
        %v970 = vpack.c.b16 %v806, %v804
        %v971 = vpack.c.b16 %v807, %v805
        %v972 = vpack.c.b16 %v810, %v808
        %v973 = vpack.c.b16 %v811, %v809
        %v974 = vpack.c.b16 %v814, %v812
        %v975 = vpack.c.b16 %v815, %v813
        %v976 = vpack.c.b16 %v818, %v816
        %v977 = vpack.c.b16 %v819, %v817
        %v978 = vpack.c.b16 %v822, %v820
        %v979 = vpack.c.b16 %v823, %v821
        %v980 = vpack.c.b16 %v826, %v824
        %v981 = vpack.c.b16 %v827, %v825
        %v982 = vpack.c.b16 %v830, %v828
        %v983 = vpack.c.b16 %v831, %v829
        %v984 = vpack.c.b16 %v834, %v832
        %v985 = vpack.c.b16 %v835, %v833
        %v986 = vpack.c.b16 %v838, %v836
        %v987 = vpack.c.b16 %v839, %v837
        %v988 = vpack.c.b16 %v842, %v840
        %v989 = vpack.c.b16 %v843, %v841
        %v990 = vpack.c.b16 %v846, %v844
        %v991 = vpack.c.b16 %v847, %v845
        %v992 = vpack.c.b16 %v850, %v848
        %v993 = vpack.c.b16 %v851, %v849
        %v994 = vpack.c.b16 %v854, %v852
        %v995 = vpack.c.b16 %v855, %v853
        %v996 = vpack.c.b16 %v858, %v856
        %v997 = vpack.c.b16 %v859, %v857
        %v998 = vpack.c.b16 %v862, %v860
        %v999 = vpack.c.b16 %v863, %v861
        %v1000 = vpack.c.b16 %v866, %v864
        %v1001 = vpack.c.b16 %v867, %v865
        %v1002 = vpack.c.b16 %v870, %v868
        %v1003 = vpack.c.b16 %v871, %v869
        %v1004 = vpack.c.b16 %v874, %v872
        %v1005 = vpack.c.b16 %v875, %v873
        %v1006 = vpack.c.b16 %v878, %v876
        %v1007 = vpack.c.b16 %v879, %v877
        %v1008 = vpack.c.b16 %v882, %v880
        %v1009 = vpack.c.b16 %v883, %v881
        %v1010 = vpack.c.b16 %v886, %v884
        %v1011 = vpack.c.b16 %v887, %v885
        %v1012 = vpack.c.b16 %v890, %v888
        %v1013 = vpack.c.b16 %v891, %v889
        %v1014 = vpack.c.b16 %v894, %v892
        %v1015 = vpack.c.b16 %v895, %v893
        %v1016 = vpack.c.b16 %v898, %v896
        %v1017 = vpack.c.b16 %v899, %v897
        %v1018 = vpack.c.b16 %v902, %v900
        %v1019 = vpack.c.b16 %v903, %v901
        %v1020 = vpack.c.b16 %v906, %v904
        %v1021 = vpack.c.b16 %v907, %v905
        %v1022 = vpack.c.b16 %v910, %v908
        %v1023 = vpack.c.b16 %v911, %v909
        %v1024 = vpack.c.b16 %v914, %v912
        %v1025 = vpack.c.b16 %v915, %v913
        %v1026 = vpack.c.b16 %v918, %v916
        %v1027 = vpack.c.b16 %v919, %v917
        %v1028 = vpack.c.b16 %v922, %v920
        %v1029 = vpack.c.b16 %v923, %v921
        %v1030 = vpack.c.b16 %v926, %v924
        %v1031 = vpack.c.b16 %v927, %v925
        %v1032 = vpack.c.b16 %v930, %v928
        %v1033 = vpack.c.b16 %v931, %v929
        %v1034 = vpack.c.b16 %v934, %v932
        %v1035 = vpack.c.b16 %v935, %v933
        %v1036 = vpack.c.b16 %v938, %v936
        %v1037 = vpack.c.b16 %v939, %v937
        %v1038 = vpack.c.b16 %v942, %v940
        %v1039 = vpack.c.b16 %v943, %v941
        %1136 = vmatpush.bf16.msra.mxu0 %v958
        %1137 = vmatpush.bf16.msra.mxu0 %v956
        %1138 = vmatpush.bf16.msra.mxu0 %v954
        %1139 = vmatpush.bf16.msra.mxu0 %v952
        %1140 = vmatpush.bf16.msra.mxu0 %v950
        %1141 = vmatpush.bf16.msra.mxu0 %v948
        %1142 = vmatpush.bf16.msra.mxu0 %v946
        %1143 = vmatpush.bf16.msra.mxu0 %v944
        %1144 = vmatmul.bf16.gmra.mxu0 %v458
        %v1145 = vpop.f32.mrf.mxu0
        %v1146 = vadd.f32 %v652, %v1145
        %v1147 = vpop.f32.mrf.mxu0
        %v1148 = vadd.f32 %v652, %v1147
        %1149 = vmatmul.bf16.gmra.mxu0 %v464
        %v1150 = vpop.f32.mrf.mxu0
        %v1151 = vadd.f32 %v652, %v1150
        %v1152 = vpop.f32.mrf.mxu0
        %v1153 = vadd.f32 %v652, %v1152
        %1154 = vmatmul.bf16.gmra.mxu0 %v470
        %v1155 = vpop.f32.mrf.mxu0
        %v1156 = vadd.f32 %v652, %v1155
        %v1157 = vpop.f32.mrf.mxu0
        %v1158 = vadd.f32 %v652, %v1157
        %1159 = vmatmul.bf16.gmra.mxu0 %v476
        %v1160 = vpop.f32.mrf.mxu0
        %v1161 = vadd.f32 %v652, %v1160
        %v1162 = vpop.f32.mrf.mxu0
        %v1163 = vadd.f32 %v652, %v1162
        %1164 = vmatmul.bf16.gmra.mxu0 %v482
        %v1165 = vpop.f32.mrf.mxu0
        %v1166 = vadd.f32 %v652, %v1165
        %v1167 = vpop.f32.mrf.mxu0
        %v1168 = vadd.f32 %v652, %v1167
        %1169 = vmatmul.bf16.gmra.mxu0 %v488
        %v1170 = vpop.f32.mrf.mxu0
        %v1171 = vadd.f32 %v652, %v1170
        %v1172 = vpop.f32.mrf.mxu0
        %v1173 = vadd.f32 %v652, %v1172
        %1174 = vmatmul.bf16.gmra.mxu0 %v494
        %v1175 = vpop.f32.mrf.mxu0
        %v1176 = vadd.f32 %v652, %v1175
        %v1177 = vpop.f32.mrf.mxu0
        %v1178 = vadd.f32 %v652, %v1177
        %1179 = vmatmul.bf16.gmra.mxu0 %v500
        %v1180 = vpop.f32.mrf.mxu0
        %v1181 = vadd.f32 %v652, %v1180
        %v1182 = vpop.f32.mrf.mxu0
        %v1183 = vadd.f32 %v652, %v1182
        %1184 = vmatmul.bf16.gmra.mxu0 %v506
        %v1185 = vpop.f32.mrf.mxu0
        %v1186 = vadd.f32 %v652, %v1185
        %v1187 = vpop.f32.mrf.mxu0
        %v1188 = vadd.f32 %v652, %v1187
        %1189 = vmatmul.bf16.gmra.mxu0 %v512
        %v1190 = vpop.f32.mrf.mxu0
        %v1191 = vadd.f32 %v652, %v1190
        %v1192 = vpop.f32.mrf.mxu0
        %v1193 = vadd.f32 %v652, %v1192
        %1194 = vmatmul.bf16.gmra.mxu0 %v518
        %v1195 = vpop.f32.mrf.mxu0
        %v1196 = vadd.f32 %v652, %v1195
        %v1197 = vpop.f32.mrf.mxu0
        %v1198 = vadd.f32 %v652, %v1197
        %1199 = vmatmul.bf16.gmra.mxu0 %v524
        %v1200 = vpop.f32.mrf.mxu0
        %v1201 = vadd.f32 %v652, %v1200
        %v1202 = vpop.f32.mrf.mxu0
        %v1203 = vadd.f32 %v652, %v1202
        %1204 = vmatmul.bf16.gmra.mxu0 %v530
        %v1205 = vpop.f32.mrf.mxu0
        %v1206 = vadd.f32 %v652, %v1205
        %v1207 = vpop.f32.mrf.mxu0
        %v1208 = vadd.f32 %v652, %v1207
        %1209 = vmatmul.bf16.gmra.mxu0 %v536
        %v1210 = vpop.f32.mrf.mxu0
        %v1211 = vadd.f32 %v652, %v1210
        %v1212 = vpop.f32.mrf.mxu0
        %v1213 = vadd.f32 %v652, %v1212
        %1214 = vmatmul.bf16.gmra.mxu0 %v542
        %v1215 = vpop.f32.mrf.mxu0
        %v1216 = vadd.f32 %v652, %v1215
        %v1217 = vpop.f32.mrf.mxu0
        %v1218 = vadd.f32 %v652, %v1217
        %1219 = vmatmul.bf16.gmra.mxu0 %v548
        %v1220 = vpop.f32.mrf.mxu0
        %v1221 = vadd.f32 %v652, %v1220
        %v1222 = vpop.f32.mrf.mxu0
        %v1223 = vadd.f32 %v652, %v1222
        %1224 = vdwg.mxu0
        %1225 = vmatpush.bf16.msra.mxu0 %v974
        %1226 = vmatpush.bf16.msra.mxu0 %v972
        %1227 = vmatpush.bf16.msra.mxu0 %v970
        %1228 = vmatpush.bf16.msra.mxu0 %v968
        %1229 = vmatpush.bf16.msra.mxu0 %v966
        %1230 = vmatpush.bf16.msra.mxu0 %v964
        %1231 = vmatpush.bf16.msra.mxu0 %v962
        %1232 = vmatpush.bf16.msra.mxu0 %v960
        %1233 = vmatmul.bf16.gmra.mxu0 %v459
        %v1234 = vpop.f32.mrf.mxu0
        %v1235 = vadd.f32 %v1146, %v1234
        %v1236 = vpop.f32.mrf.mxu0
        %v1237 = vadd.f32 %v1148, %v1236
        %1238 = vmatmul.bf16.gmra.mxu0 %v465
        %v1239 = vpop.f32.mrf.mxu0
        %v1240 = vadd.f32 %v1151, %v1239
        %v1241 = vpop.f32.mrf.mxu0
        %v1242 = vadd.f32 %v1153, %v1241
        %1243 = vmatmul.bf16.gmra.mxu0 %v471
        %v1244 = vpop.f32.mrf.mxu0
        %v1245 = vadd.f32 %v1156, %v1244
        %v1246 = vpop.f32.mrf.mxu0
        %v1247 = vadd.f32 %v1158, %v1246
        %1248 = vmatmul.bf16.gmra.mxu0 %v477
        %v1249 = vpop.f32.mrf.mxu0
        %v1250 = vadd.f32 %v1161, %v1249
        %v1251 = vpop.f32.mrf.mxu0
        %v1252 = vadd.f32 %v1163, %v1251
        %1253 = vmatmul.bf16.gmra.mxu0 %v483
        %v1254 = vpop.f32.mrf.mxu0
        %v1255 = vadd.f32 %v1166, %v1254
        %v1256 = vpop.f32.mrf.mxu0
        %v1257 = vadd.f32 %v1168, %v1256
        %1258 = vmatmul.bf16.gmra.mxu0 %v489
        %v1259 = vpop.f32.mrf.mxu0
        %v1260 = vadd.f32 %v1171, %v1259
        %v1261 = vpop.f32.mrf.mxu0
        %v1262 = vadd.f32 %v1173, %v1261
        %1263 = vmatmul.bf16.gmra.mxu0 %v495
        %v1264 = vpop.f32.mrf.mxu0
        %v1265 = vadd.f32 %v1176, %v1264
        %v1266 = vpop.f32.mrf.mxu0
        %v1267 = vadd.f32 %v1178, %v1266
        %1268 = vmatmul.bf16.gmra.mxu0 %v501
        %v1269 = vpop.f32.mrf.mxu0
        %v1270 = vadd.f32 %v1181, %v1269
        %v1271 = vpop.f32.mrf.mxu0
        %v1272 = vadd.f32 %v1183, %v1271
        %1273 = vmatmul.bf16.gmra.mxu0 %v507
        %v1274 = vpop.f32.mrf.mxu0
        %v1275 = vadd.f32 %v1186, %v1274
        %v1276 = vpop.f32.mrf.mxu0
        %v1277 = vadd.f32 %v1188, %v1276
        %1278 = vmatmul.bf16.gmra.mxu0 %v513
        %v1279 = vpop.f32.mrf.mxu0
        %v1280 = vadd.f32 %v1191, %v1279
        %v1281 = vpop.f32.mrf.mxu0
        %v1282 = vadd.f32 %v1193, %v1281
        %1283 = vmatmul.bf16.gmra.mxu0 %v519
        %v1284 = vpop.f32.mrf.mxu0
        %v1285 = vadd.f32 %v1196, %v1284
        %v1286 = vpop.f32.mrf.mxu0
        %v1287 = vadd.f32 %v1198, %v1286
        %1288 = vmatmul.bf16.gmra.mxu0 %v525
        %v1289 = vpop.f32.mrf.mxu0
        %v1290 = vadd.f32 %v1201, %v1289
        %v1291 = vpop.f32.mrf.mxu0
        %v1292 = vadd.f32 %v1203, %v1291
        %1293 = vmatmul.bf16.gmra.mxu0 %v531
        %v1294 = vpop.f32.mrf.mxu0
        %v1295 = vadd.f32 %v1206, %v1294
        %v1296 = vpop.f32.mrf.mxu0
        %v1297 = vadd.f32 %v1208, %v1296
        %1298 = vmatmul.bf16.gmra.mxu0 %v537
        %v1299 = vpop.f32.mrf.mxu0
        %v1300 = vadd.f32 %v1211, %v1299
        %v1301 = vpop.f32.mrf.mxu0
        %v1302 = vadd.f32 %v1213, %v1301
        %1303 = vmatmul.bf16.gmra.mxu0 %v543
        %v1304 = vpop.f32.mrf.mxu0
        %v1305 = vadd.f32 %v1216, %v1304
        %v1306 = vpop.f32.mrf.mxu0
        %v1307 = vadd.f32 %v1218, %v1306
        %1308 = vmatmul.bf16.gmra.mxu0 %v549
        %v1309 = vpop.f32.mrf.mxu0
        %v1310 = vadd.f32 %v1221, %v1309
        %v1311 = vpop.f32.mrf.mxu0
        %v1312 = vadd.f32 %v1223, %v1311
        %1313 = vdwg.mxu0
        %1314 = vmatpush.bf16.msra.mxu0 %v990
        %1315 = vmatpush.bf16.msra.mxu0 %v988
        %1316 = vmatpush.bf16.msra.mxu0 %v986
        %1317 = vmatpush.bf16.msra.mxu0 %v984
        %1318 = vmatpush.bf16.msra.mxu0 %v982
        %1319 = vmatpush.bf16.msra.mxu0 %v980
        %1320 = vmatpush.bf16.msra.mxu0 %v978
        %1321 = vmatpush.bf16.msra.mxu0 %v976
        %1322 = vmatmul.bf16.gmra.mxu0 %v460
        %v1323 = vpop.f32.mrf.mxu0
        %v1324 = vadd.f32 %v1235, %v1323
        %v1325 = vpop.f32.mrf.mxu0
        %v1326 = vadd.f32 %v1237, %v1325
        %1327 = vmatmul.bf16.gmra.mxu0 %v466
        %v1328 = vpop.f32.mrf.mxu0
        %v1329 = vadd.f32 %v1240, %v1328
        %v1330 = vpop.f32.mrf.mxu0
        %v1331 = vadd.f32 %v1242, %v1330
        %1332 = vmatmul.bf16.gmra.mxu0 %v472
        %v1333 = vpop.f32.mrf.mxu0
        %v1334 = vadd.f32 %v1245, %v1333
        %v1335 = vpop.f32.mrf.mxu0
        %v1336 = vadd.f32 %v1247, %v1335
        %1337 = vmatmul.bf16.gmra.mxu0 %v478
        %v1338 = vpop.f32.mrf.mxu0
        %v1339 = vadd.f32 %v1250, %v1338
        %v1340 = vpop.f32.mrf.mxu0
        %v1341 = vadd.f32 %v1252, %v1340
        %1342 = vmatmul.bf16.gmra.mxu0 %v484
        %v1343 = vpop.f32.mrf.mxu0
        %v1344 = vadd.f32 %v1255, %v1343
        %v1345 = vpop.f32.mrf.mxu0
        %v1346 = vadd.f32 %v1257, %v1345
        %1347 = vmatmul.bf16.gmra.mxu0 %v490
        %v1348 = vpop.f32.mrf.mxu0
        %v1349 = vadd.f32 %v1260, %v1348
        %v1350 = vpop.f32.mrf.mxu0
        %v1351 = vadd.f32 %v1262, %v1350
        %1352 = vmatmul.bf16.gmra.mxu0 %v496
        %v1353 = vpop.f32.mrf.mxu0
        %v1354 = vadd.f32 %v1265, %v1353
        %v1355 = vpop.f32.mrf.mxu0
        %v1356 = vadd.f32 %v1267, %v1355
        %1357 = vmatmul.bf16.gmra.mxu0 %v502
        %v1358 = vpop.f32.mrf.mxu0
        %v1359 = vadd.f32 %v1270, %v1358
        %v1360 = vpop.f32.mrf.mxu0
        %v1361 = vadd.f32 %v1272, %v1360
        %1362 = vmatmul.bf16.gmra.mxu0 %v508
        %v1363 = vpop.f32.mrf.mxu0
        %v1364 = vadd.f32 %v1275, %v1363
        %v1365 = vpop.f32.mrf.mxu0
        %v1366 = vadd.f32 %v1277, %v1365
        %1367 = vmatmul.bf16.gmra.mxu0 %v514
        %v1368 = vpop.f32.mrf.mxu0
        %v1369 = vadd.f32 %v1280, %v1368
        %v1370 = vpop.f32.mrf.mxu0
        %v1371 = vadd.f32 %v1282, %v1370
        %1372 = vmatmul.bf16.gmra.mxu0 %v520
        %v1373 = vpop.f32.mrf.mxu0
        %v1374 = vadd.f32 %v1285, %v1373
        %v1375 = vpop.f32.mrf.mxu0
        %v1376 = vadd.f32 %v1287, %v1375
        %1377 = vmatmul.bf16.gmra.mxu0 %v526
        %v1378 = vpop.f32.mrf.mxu0
        %v1379 = vadd.f32 %v1290, %v1378
        %v1380 = vpop.f32.mrf.mxu0
        %v1381 = vadd.f32 %v1292, %v1380
        %1382 = vmatmul.bf16.gmra.mxu0 %v532
        %v1383 = vpop.f32.mrf.mxu0
        %v1384 = vadd.f32 %v1295, %v1383
        %v1385 = vpop.f32.mrf.mxu0
        %v1386 = vadd.f32 %v1297, %v1385
        %1387 = vmatmul.bf16.gmra.mxu0 %v538
        %v1388 = vpop.f32.mrf.mxu0
        %v1389 = vadd.f32 %v1300, %v1388
        %v1390 = vpop.f32.mrf.mxu0
        %v1391 = vadd.f32 %v1302, %v1390
        %1392 = vmatmul.bf16.gmra.mxu0 %v544
        %v1393 = vpop.f32.mrf.mxu0
        %v1394 = vadd.f32 %v1305, %v1393
        %v1395 = vpop.f32.mrf.mxu0
        %v1396 = vadd.f32 %v1307, %v1395
        %1397 = vmatmul.bf16.gmra.mxu0 %v550
        %v1398 = vpop.f32.mrf.mxu0
        %v1399 = vadd.f32 %v1310, %v1398
        %v1400 = vpop.f32.mrf.mxu0
        %v1401 = vadd.f32 %v1312, %v1400
        %1402 = vdwg.mxu0
        %1403 = vmatpush.bf16.msra.mxu0 %v1006
        %1404 = vmatpush.bf16.msra.mxu0 %v1004
        %1405 = vmatpush.bf16.msra.mxu0 %v1002
        %1406 = vmatpush.bf16.msra.mxu0 %v1000
        %1407 = vmatpush.bf16.msra.mxu0 %v998
        %1408 = vmatpush.bf16.msra.mxu0 %v996
        %1409 = vmatpush.bf16.msra.mxu0 %v994
        %1410 = vmatpush.bf16.msra.mxu0 %v992
        %1411 = vmatmul.bf16.gmra.mxu0 %v461
        %v1412 = vpop.f32.mrf.mxu0
        %v1413 = vadd.f32 %v1324, %v1412
        %v1414 = vpop.f32.mrf.mxu0
        %v1415 = vadd.f32 %v1326, %v1414
        %1416 = vmatmul.bf16.gmra.mxu0 %v467
        %v1417 = vpop.f32.mrf.mxu0
        %v1418 = vadd.f32 %v1329, %v1417
        %v1419 = vpop.f32.mrf.mxu0
        %v1420 = vadd.f32 %v1331, %v1419
        %1421 = vmatmul.bf16.gmra.mxu0 %v473
        %v1422 = vpop.f32.mrf.mxu0
        %v1423 = vadd.f32 %v1334, %v1422
        %v1424 = vpop.f32.mrf.mxu0
        %v1425 = vadd.f32 %v1336, %v1424
        %1426 = vmatmul.bf16.gmra.mxu0 %v479
        %v1427 = vpop.f32.mrf.mxu0
        %v1428 = vadd.f32 %v1339, %v1427
        %v1429 = vpop.f32.mrf.mxu0
        %v1430 = vadd.f32 %v1341, %v1429
        %1431 = vmatmul.bf16.gmra.mxu0 %v485
        %v1432 = vpop.f32.mrf.mxu0
        %v1433 = vadd.f32 %v1344, %v1432
        %v1434 = vpop.f32.mrf.mxu0
        %v1435 = vadd.f32 %v1346, %v1434
        %1436 = vmatmul.bf16.gmra.mxu0 %v491
        %v1437 = vpop.f32.mrf.mxu0
        %v1438 = vadd.f32 %v1349, %v1437
        %v1439 = vpop.f32.mrf.mxu0
        %v1440 = vadd.f32 %v1351, %v1439
        %1441 = vmatmul.bf16.gmra.mxu0 %v497
        %v1442 = vpop.f32.mrf.mxu0
        %v1443 = vadd.f32 %v1354, %v1442
        %v1444 = vpop.f32.mrf.mxu0
        %v1445 = vadd.f32 %v1356, %v1444
        %1446 = vmatmul.bf16.gmra.mxu0 %v503
        %v1447 = vpop.f32.mrf.mxu0
        %v1448 = vadd.f32 %v1359, %v1447
        %v1449 = vpop.f32.mrf.mxu0
        %v1450 = vadd.f32 %v1361, %v1449
        %1451 = vmatmul.bf16.gmra.mxu0 %v509
        %v1452 = vpop.f32.mrf.mxu0
        %v1453 = vadd.f32 %v1364, %v1452
        %v1454 = vpop.f32.mrf.mxu0
        %v1455 = vadd.f32 %v1366, %v1454
        %1456 = vmatmul.bf16.gmra.mxu0 %v515
        %v1457 = vpop.f32.mrf.mxu0
        %v1458 = vadd.f32 %v1369, %v1457
        %v1459 = vpop.f32.mrf.mxu0
        %v1460 = vadd.f32 %v1371, %v1459
        %1461 = vmatmul.bf16.gmra.mxu0 %v521
        %v1462 = vpop.f32.mrf.mxu0
        %v1463 = vadd.f32 %v1374, %v1462
        %v1464 = vpop.f32.mrf.mxu0
        %v1465 = vadd.f32 %v1376, %v1464
        %1466 = vmatmul.bf16.gmra.mxu0 %v527
        %v1467 = vpop.f32.mrf.mxu0
        %v1468 = vadd.f32 %v1379, %v1467
        %v1469 = vpop.f32.mrf.mxu0
        %v1470 = vadd.f32 %v1381, %v1469
        %1471 = vmatmul.bf16.gmra.mxu0 %v533
        %v1472 = vpop.f32.mrf.mxu0
        %v1473 = vadd.f32 %v1384, %v1472
        %v1474 = vpop.f32.mrf.mxu0
        %v1475 = vadd.f32 %v1386, %v1474
        %1476 = vmatmul.bf16.gmra.mxu0 %v539
        %v1477 = vpop.f32.mrf.mxu0
        %v1478 = vadd.f32 %v1389, %v1477
        %v1479 = vpop.f32.mrf.mxu0
        %v1480 = vadd.f32 %v1391, %v1479
        %1481 = vmatmul.bf16.gmra.mxu0 %v545
        %v1482 = vpop.f32.mrf.mxu0
        %v1483 = vadd.f32 %v1394, %v1482
        %v1484 = vpop.f32.mrf.mxu0
        %v1485 = vadd.f32 %v1396, %v1484
        %1486 = vmatmul.bf16.gmra.mxu0 %v551
        %v1487 = vpop.f32.mrf.mxu0
        %v1488 = vadd.f32 %v1399, %v1487
        %v1489 = vpop.f32.mrf.mxu0
        %v1490 = vadd.f32 %v1401, %v1489
        %1491 = vdwg.mxu0
        %1492 = vmatpush.bf16.msra.mxu0 %v1022
        %1493 = vmatpush.bf16.msra.mxu0 %v1020
        %1494 = vmatpush.bf16.msra.mxu0 %v1018
        %1495 = vmatpush.bf16.msra.mxu0 %v1016
        %1496 = vmatpush.bf16.msra.mxu0 %v1014
        %1497 = vmatpush.bf16.msra.mxu0 %v1012
        %1498 = vmatpush.bf16.msra.mxu0 %v1010
        %1499 = vmatpush.bf16.msra.mxu0 %v1008
        %1500 = vmatmul.bf16.gmra.mxu0 %v462
        %v1501 = vpop.f32.mrf.mxu0
        %v1502 = vadd.f32 %v1413, %v1501
        %v1503 = vpop.f32.mrf.mxu0
        %v1504 = vadd.f32 %v1415, %v1503
        %1505 = vmatmul.bf16.gmra.mxu0 %v468
        %v1506 = vpop.f32.mrf.mxu0
        %v1507 = vadd.f32 %v1418, %v1506
        %v1508 = vpop.f32.mrf.mxu0
        %v1509 = vadd.f32 %v1420, %v1508
        %1510 = vmatmul.bf16.gmra.mxu0 %v474
        %v1511 = vpop.f32.mrf.mxu0
        %v1512 = vadd.f32 %v1423, %v1511
        %v1513 = vpop.f32.mrf.mxu0
        %v1514 = vadd.f32 %v1425, %v1513
        %1515 = vmatmul.bf16.gmra.mxu0 %v480
        %v1516 = vpop.f32.mrf.mxu0
        %v1517 = vadd.f32 %v1428, %v1516
        %v1518 = vpop.f32.mrf.mxu0
        %v1519 = vadd.f32 %v1430, %v1518
        %1520 = vmatmul.bf16.gmra.mxu0 %v486
        %v1521 = vpop.f32.mrf.mxu0
        %v1522 = vadd.f32 %v1433, %v1521
        %v1523 = vpop.f32.mrf.mxu0
        %v1524 = vadd.f32 %v1435, %v1523
        %1525 = vmatmul.bf16.gmra.mxu0 %v492
        %v1526 = vpop.f32.mrf.mxu0
        %v1527 = vadd.f32 %v1438, %v1526
        %v1528 = vpop.f32.mrf.mxu0
        %v1529 = vadd.f32 %v1440, %v1528
        %1530 = vmatmul.bf16.gmra.mxu0 %v498
        %v1531 = vpop.f32.mrf.mxu0
        %v1532 = vadd.f32 %v1443, %v1531
        %v1533 = vpop.f32.mrf.mxu0
        %v1534 = vadd.f32 %v1445, %v1533
        %1535 = vmatmul.bf16.gmra.mxu0 %v504
        %v1536 = vpop.f32.mrf.mxu0
        %v1537 = vadd.f32 %v1448, %v1536
        %v1538 = vpop.f32.mrf.mxu0
        %v1539 = vadd.f32 %v1450, %v1538
        %1540 = vmatmul.bf16.gmra.mxu0 %v510
        %v1541 = vpop.f32.mrf.mxu0
        %v1542 = vadd.f32 %v1453, %v1541
        %v1543 = vpop.f32.mrf.mxu0
        %v1544 = vadd.f32 %v1455, %v1543
        %1545 = vmatmul.bf16.gmra.mxu0 %v516
        %v1546 = vpop.f32.mrf.mxu0
        %v1547 = vadd.f32 %v1458, %v1546
        %v1548 = vpop.f32.mrf.mxu0
        %v1549 = vadd.f32 %v1460, %v1548
        %1550 = vmatmul.bf16.gmra.mxu0 %v522
        %v1551 = vpop.f32.mrf.mxu0
        %v1552 = vadd.f32 %v1463, %v1551
        %v1553 = vpop.f32.mrf.mxu0
        %v1554 = vadd.f32 %v1465, %v1553
        %1555 = vmatmul.bf16.gmra.mxu0 %v528
        %v1556 = vpop.f32.mrf.mxu0
        %v1557 = vadd.f32 %v1468, %v1556
        %v1558 = vpop.f32.mrf.mxu0
        %v1559 = vadd.f32 %v1470, %v1558
        %1560 = vmatmul.bf16.gmra.mxu0 %v534
        %v1561 = vpop.f32.mrf.mxu0
        %v1562 = vadd.f32 %v1473, %v1561
        %v1563 = vpop.f32.mrf.mxu0
        %v1564 = vadd.f32 %v1475, %v1563
        %1565 = vmatmul.bf16.gmra.mxu0 %v540
        %v1566 = vpop.f32.mrf.mxu0
        %v1567 = vadd.f32 %v1478, %v1566
        %v1568 = vpop.f32.mrf.mxu0
        %v1569 = vadd.f32 %v1480, %v1568
        %1570 = vmatmul.bf16.gmra.mxu0 %v546
        %v1571 = vpop.f32.mrf.mxu0
        %v1572 = vadd.f32 %v1483, %v1571
        %v1573 = vpop.f32.mrf.mxu0
        %v1574 = vadd.f32 %v1485, %v1573
        %1575 = vmatmul.bf16.gmra.mxu0 %v552
        %v1576 = vpop.f32.mrf.mxu0
        %v1577 = vadd.f32 %v1488, %v1576
        %v1578 = vpop.f32.mrf.mxu0
        %v1579 = vadd.f32 %v1490, %v1578
        %1580 = vdwg.mxu0
        %1581 = vmatpush.bf16.msra.mxu0 %v1038
        %1582 = vmatpush.bf16.msra.mxu0 %v1036
        %1583 = vmatpush.bf16.msra.mxu0 %v1034
        %1584 = vmatpush.bf16.msra.mxu0 %v1032
        %1585 = vmatpush.bf16.msra.mxu0 %v1030
        %1586 = vmatpush.bf16.msra.mxu0 %v1028
        %1587 = vmatpush.bf16.msra.mxu0 %v1026
        %1588 = vmatpush.bf16.msra.mxu0 %v1024
        %1589 = vmatmul.bf16.gmra.mxu0 %v463
        %v1590 = vpop.f32.mrf.mxu0
        %v1591 = vadd.f32 %v1502, %v1590
        %v1592 = vpop.f32.mrf.mxu0
        %v1593 = vadd.f32 %v1504, %v1592
        %1594 = vmatmul.bf16.gmra.mxu0 %v469
        %v1595 = vpop.f32.mrf.mxu0
        %v1596 = vadd.f32 %v1507, %v1595
        %v1597 = vpop.f32.mrf.mxu0
        %v1598 = vadd.f32 %v1509, %v1597
        %1599 = vmatmul.bf16.gmra.mxu0 %v475
        %v1600 = vpop.f32.mrf.mxu0
        %v1601 = vadd.f32 %v1512, %v1600
        %v1602 = vpop.f32.mrf.mxu0
        %v1603 = vadd.f32 %v1514, %v1602
        %1604 = vmatmul.bf16.gmra.mxu0 %v481
        %v1605 = vpop.f32.mrf.mxu0
        %v1606 = vadd.f32 %v1517, %v1605
        %v1607 = vpop.f32.mrf.mxu0
        %v1608 = vadd.f32 %v1519, %v1607
        %1609 = vmatmul.bf16.gmra.mxu0 %v487
        %v1610 = vpop.f32.mrf.mxu0
        %v1611 = vadd.f32 %v1522, %v1610
        %v1612 = vpop.f32.mrf.mxu0
        %v1613 = vadd.f32 %v1524, %v1612
        %1614 = vmatmul.bf16.gmra.mxu0 %v493
        %v1615 = vpop.f32.mrf.mxu0
        %v1616 = vadd.f32 %v1527, %v1615
        %v1617 = vpop.f32.mrf.mxu0
        %v1618 = vadd.f32 %v1529, %v1617
        %1619 = vmatmul.bf16.gmra.mxu0 %v499
        %v1620 = vpop.f32.mrf.mxu0
        %v1621 = vadd.f32 %v1532, %v1620
        %v1622 = vpop.f32.mrf.mxu0
        %v1623 = vadd.f32 %v1534, %v1622
        %1624 = vmatmul.bf16.gmra.mxu0 %v505
        %v1625 = vpop.f32.mrf.mxu0
        %v1626 = vadd.f32 %v1537, %v1625
        %v1627 = vpop.f32.mrf.mxu0
        %v1628 = vadd.f32 %v1539, %v1627
        %1629 = vmatmul.bf16.gmra.mxu0 %v511
        %v1630 = vpop.f32.mrf.mxu0
        %v1631 = vadd.f32 %v1542, %v1630
        %v1632 = vpop.f32.mrf.mxu0
        %v1633 = vadd.f32 %v1544, %v1632
        %1634 = vmatmul.bf16.gmra.mxu0 %v517
        %v1635 = vpop.f32.mrf.mxu0
        %v1636 = vadd.f32 %v1547, %v1635
        %v1637 = vpop.f32.mrf.mxu0
        %v1638 = vadd.f32 %v1549, %v1637
        %1639 = vmatmul.bf16.gmra.mxu0 %v523
        %v1640 = vpop.f32.mrf.mxu0
        %v1641 = vadd.f32 %v1552, %v1640
        %v1642 = vpop.f32.mrf.mxu0
        %v1643 = vadd.f32 %v1554, %v1642
        %1644 = vmatmul.bf16.gmra.mxu0 %v529
        %v1645 = vpop.f32.mrf.mxu0
        %v1646 = vadd.f32 %v1557, %v1645
        %v1647 = vpop.f32.mrf.mxu0
        %v1648 = vadd.f32 %v1559, %v1647
        %1649 = vmatmul.bf16.gmra.mxu0 %v535
        %v1650 = vpop.f32.mrf.mxu0
        %v1651 = vadd.f32 %v1562, %v1650
        %v1652 = vpop.f32.mrf.mxu0
        %v1653 = vadd.f32 %v1564, %v1652
        %1654 = vmatmul.bf16.gmra.mxu0 %v541
        %v1655 = vpop.f32.mrf.mxu0
        %v1656 = vadd.f32 %v1567, %v1655
        %v1657 = vpop.f32.mrf.mxu0
        %v1658 = vadd.f32 %v1569, %v1657
        %1659 = vmatmul.bf16.gmra.mxu0 %v547
        %v1660 = vpop.f32.mrf.mxu0
        %v1661 = vadd.f32 %v1572, %v1660
        %v1662 = vpop.f32.mrf.mxu0
        %v1663 = vadd.f32 %v1574, %v1662
        %1664 = vmatmul.bf16.gmra.mxu0 %v553
        %v1665 = vpop.f32.mrf.mxu0
        %v1666 = vadd.f32 %v1577, %v1665
        %v1667 = vpop.f32.mrf.mxu0
        %v1668 = vadd.f32 %v1579, %v1667
        %1669 = vdwg.mxu0
        %1670 = vmatpush.bf16.msra.mxu0 %v959
        %1671 = vmatpush.bf16.msra.mxu0 %v957
        %1672 = vmatpush.bf16.msra.mxu0 %v955
        %1673 = vmatpush.bf16.msra.mxu0 %v953
        %1674 = vmatpush.bf16.msra.mxu0 %v951
        %1675 = vmatpush.bf16.msra.mxu0 %v949
        %1676 = vmatpush.bf16.msra.mxu0 %v947
        %1677 = vmatpush.bf16.msra.mxu0 %v945
        %1678 = vmatmul.bf16.gmra.mxu0 %v458
        %v1679 = vpop.f32.mrf.mxu0
        %v1680 = vadd.f32 %v653, %v1679
        %v1681 = vpop.f32.mrf.mxu0
        %v1682 = vadd.f32 %v653, %v1681
        %1683 = vmatmul.bf16.gmra.mxu0 %v464
        %v1684 = vpop.f32.mrf.mxu0
        %v1685 = vadd.f32 %v653, %v1684
        %v1686 = vpop.f32.mrf.mxu0
        %v1687 = vadd.f32 %v653, %v1686
        %1688 = vmatmul.bf16.gmra.mxu0 %v470
        %v1689 = vpop.f32.mrf.mxu0
        %v1690 = vadd.f32 %v653, %v1689
        %v1691 = vpop.f32.mrf.mxu0
        %v1692 = vadd.f32 %v653, %v1691
        %1693 = vmatmul.bf16.gmra.mxu0 %v476
        %v1694 = vpop.f32.mrf.mxu0
        %v1695 = vadd.f32 %v653, %v1694
        %v1696 = vpop.f32.mrf.mxu0
        %v1697 = vadd.f32 %v653, %v1696
        %1698 = vmatmul.bf16.gmra.mxu0 %v482
        %v1699 = vpop.f32.mrf.mxu0
        %v1700 = vadd.f32 %v653, %v1699
        %v1701 = vpop.f32.mrf.mxu0
        %v1702 = vadd.f32 %v653, %v1701
        %1703 = vmatmul.bf16.gmra.mxu0 %v488
        %v1704 = vpop.f32.mrf.mxu0
        %v1705 = vadd.f32 %v653, %v1704
        %v1706 = vpop.f32.mrf.mxu0
        %v1707 = vadd.f32 %v653, %v1706
        %1708 = vmatmul.bf16.gmra.mxu0 %v494
        %v1709 = vpop.f32.mrf.mxu0
        %v1710 = vadd.f32 %v653, %v1709
        %v1711 = vpop.f32.mrf.mxu0
        %v1712 = vadd.f32 %v653, %v1711
        %1713 = vmatmul.bf16.gmra.mxu0 %v500
        %v1714 = vpop.f32.mrf.mxu0
        %v1715 = vadd.f32 %v653, %v1714
        %v1716 = vpop.f32.mrf.mxu0
        %v1717 = vadd.f32 %v653, %v1716
        %1718 = vmatmul.bf16.gmra.mxu0 %v506
        %v1719 = vpop.f32.mrf.mxu0
        %v1720 = vadd.f32 %v653, %v1719
        %v1721 = vpop.f32.mrf.mxu0
        %v1722 = vadd.f32 %v653, %v1721
        %1723 = vmatmul.bf16.gmra.mxu0 %v512
        %v1724 = vpop.f32.mrf.mxu0
        %v1725 = vadd.f32 %v653, %v1724
        %v1726 = vpop.f32.mrf.mxu0
        %v1727 = vadd.f32 %v653, %v1726
        %1728 = vmatmul.bf16.gmra.mxu0 %v518
        %v1729 = vpop.f32.mrf.mxu0
        %v1730 = vadd.f32 %v653, %v1729
        %v1731 = vpop.f32.mrf.mxu0
        %v1732 = vadd.f32 %v653, %v1731
        %1733 = vmatmul.bf16.gmra.mxu0 %v524
        %v1734 = vpop.f32.mrf.mxu0
        %v1735 = vadd.f32 %v653, %v1734
        %v1736 = vpop.f32.mrf.mxu0
        %v1737 = vadd.f32 %v653, %v1736
        %1738 = vmatmul.bf16.gmra.mxu0 %v530
        %v1739 = vpop.f32.mrf.mxu0
        %v1740 = vadd.f32 %v653, %v1739
        %v1741 = vpop.f32.mrf.mxu0
        %v1742 = vadd.f32 %v653, %v1741
        %1743 = vmatmul.bf16.gmra.mxu0 %v536
        %v1744 = vpop.f32.mrf.mxu0
        %v1745 = vadd.f32 %v653, %v1744
        %v1746 = vpop.f32.mrf.mxu0
        %v1747 = vadd.f32 %v653, %v1746
        %1748 = vmatmul.bf16.gmra.mxu0 %v542
        %v1749 = vpop.f32.mrf.mxu0
        %v1750 = vadd.f32 %v653, %v1749
        %v1751 = vpop.f32.mrf.mxu0
        %v1752 = vadd.f32 %v653, %v1751
        %1753 = vmatmul.bf16.gmra.mxu0 %v548
        %v1754 = vpop.f32.mrf.mxu0
        %v1755 = vadd.f32 %v653, %v1754
        %v1756 = vpop.f32.mrf.mxu0
        %v1757 = vadd.f32 %v653, %v1756
        %1758 = vdwg.mxu0
        %1759 = vmatpush.bf16.msra.mxu0 %v975
        %1760 = vmatpush.bf16.msra.mxu0 %v973
        %1761 = vmatpush.bf16.msra.mxu0 %v971
        %1762 = vmatpush.bf16.msra.mxu0 %v969
        %1763 = vmatpush.bf16.msra.mxu0 %v967
        %1764 = vmatpush.bf16.msra.mxu0 %v965
        %1765 = vmatpush.bf16.msra.mxu0 %v963
        %1766 = vmatpush.bf16.msra.mxu0 %v961
        %1767 = vmatmul.bf16.gmra.mxu0 %v459
        %v1768 = vpop.f32.mrf.mxu0
        %v1769 = vadd.f32 %v1680, %v1768
        %v1770 = vpop.f32.mrf.mxu0
        %v1771 = vadd.f32 %v1682, %v1770
        %1772 = vmatmul.bf16.gmra.mxu0 %v465
        %v1773 = vpop.f32.mrf.mxu0
        %v1774 = vadd.f32 %v1685, %v1773
        %v1775 = vpop.f32.mrf.mxu0
        %v1776 = vadd.f32 %v1687, %v1775
        %1777 = vmatmul.bf16.gmra.mxu0 %v471
        %v1778 = vpop.f32.mrf.mxu0
        %v1779 = vadd.f32 %v1690, %v1778
        %v1780 = vpop.f32.mrf.mxu0
        %v1781 = vadd.f32 %v1692, %v1780
        %1782 = vmatmul.bf16.gmra.mxu0 %v477
        %v1783 = vpop.f32.mrf.mxu0
        %v1784 = vadd.f32 %v1695, %v1783
        %v1785 = vpop.f32.mrf.mxu0
        %v1786 = vadd.f32 %v1697, %v1785
        %1787 = vmatmul.bf16.gmra.mxu0 %v483
        %v1788 = vpop.f32.mrf.mxu0
        %v1789 = vadd.f32 %v1700, %v1788
        %v1790 = vpop.f32.mrf.mxu0
        %v1791 = vadd.f32 %v1702, %v1790
        %1792 = vmatmul.bf16.gmra.mxu0 %v489
        %v1793 = vpop.f32.mrf.mxu0
        %v1794 = vadd.f32 %v1705, %v1793
        %v1795 = vpop.f32.mrf.mxu0
        %v1796 = vadd.f32 %v1707, %v1795
        %1797 = vmatmul.bf16.gmra.mxu0 %v495
        %v1798 = vpop.f32.mrf.mxu0
        %v1799 = vadd.f32 %v1710, %v1798
        %v1800 = vpop.f32.mrf.mxu0
        %v1801 = vadd.f32 %v1712, %v1800
        %1802 = vmatmul.bf16.gmra.mxu0 %v501
        %v1803 = vpop.f32.mrf.mxu0
        %v1804 = vadd.f32 %v1715, %v1803
        %v1805 = vpop.f32.mrf.mxu0
        %v1806 = vadd.f32 %v1717, %v1805
        %1807 = vmatmul.bf16.gmra.mxu0 %v507
        %v1808 = vpop.f32.mrf.mxu0
        %v1809 = vadd.f32 %v1720, %v1808
        %v1810 = vpop.f32.mrf.mxu0
        %v1811 = vadd.f32 %v1722, %v1810
        %1812 = vmatmul.bf16.gmra.mxu0 %v513
        %v1813 = vpop.f32.mrf.mxu0
        %v1814 = vadd.f32 %v1725, %v1813
        %v1815 = vpop.f32.mrf.mxu0
        %v1816 = vadd.f32 %v1727, %v1815
        %1817 = vmatmul.bf16.gmra.mxu0 %v519
        %v1818 = vpop.f32.mrf.mxu0
        %v1819 = vadd.f32 %v1730, %v1818
        %v1820 = vpop.f32.mrf.mxu0
        %v1821 = vadd.f32 %v1732, %v1820
        %1822 = vmatmul.bf16.gmra.mxu0 %v525
        %v1823 = vpop.f32.mrf.mxu0
        %v1824 = vadd.f32 %v1735, %v1823
        %v1825 = vpop.f32.mrf.mxu0
        %v1826 = vadd.f32 %v1737, %v1825
        %1827 = vmatmul.bf16.gmra.mxu0 %v531
        %v1828 = vpop.f32.mrf.mxu0
        %v1829 = vadd.f32 %v1740, %v1828
        %v1830 = vpop.f32.mrf.mxu0
        %v1831 = vadd.f32 %v1742, %v1830
        %1832 = vmatmul.bf16.gmra.mxu0 %v537
        %v1833 = vpop.f32.mrf.mxu0
        %v1834 = vadd.f32 %v1745, %v1833
        %v1835 = vpop.f32.mrf.mxu0
        %v1836 = vadd.f32 %v1747, %v1835
        %1837 = vmatmul.bf16.gmra.mxu0 %v543
        %v1838 = vpop.f32.mrf.mxu0
        %v1839 = vadd.f32 %v1750, %v1838
        %v1840 = vpop.f32.mrf.mxu0
        %v1841 = vadd.f32 %v1752, %v1840
        %1842 = vmatmul.bf16.gmra.mxu0 %v549
        %v1843 = vpop.f32.mrf.mxu0
        %v1844 = vadd.f32 %v1755, %v1843
        %v1845 = vpop.f32.mrf.mxu0
        %v1846 = vadd.f32 %v1757, %v1845
        %1847 = vdwg.mxu0
        %1848 = vmatpush.bf16.msra.mxu0 %v991
        %1849 = vmatpush.bf16.msra.mxu0 %v989
        %1850 = vmatpush.bf16.msra.mxu0 %v987
        %1851 = vmatpush.bf16.msra.mxu0 %v985
        %1852 = vmatpush.bf16.msra.mxu0 %v983
        %1853 = vmatpush.bf16.msra.mxu0 %v981
        %1854 = vmatpush.bf16.msra.mxu0 %v979
        %1855 = vmatpush.bf16.msra.mxu0 %v977
        %1856 = vmatmul.bf16.gmra.mxu0 %v460
        %v1857 = vpop.f32.mrf.mxu0
        %v1858 = vadd.f32 %v1769, %v1857
        %v1859 = vpop.f32.mrf.mxu0
        %v1860 = vadd.f32 %v1771, %v1859
        %1861 = vmatmul.bf16.gmra.mxu0 %v466
        %v1862 = vpop.f32.mrf.mxu0
        %v1863 = vadd.f32 %v1774, %v1862
        %v1864 = vpop.f32.mrf.mxu0
        %v1865 = vadd.f32 %v1776, %v1864
        %1866 = vmatmul.bf16.gmra.mxu0 %v472
        %v1867 = vpop.f32.mrf.mxu0
        %v1868 = vadd.f32 %v1779, %v1867
        %v1869 = vpop.f32.mrf.mxu0
        %v1870 = vadd.f32 %v1781, %v1869
        %1871 = vmatmul.bf16.gmra.mxu0 %v478
        %v1872 = vpop.f32.mrf.mxu0
        %v1873 = vadd.f32 %v1784, %v1872
        %v1874 = vpop.f32.mrf.mxu0
        %v1875 = vadd.f32 %v1786, %v1874
        %1876 = vmatmul.bf16.gmra.mxu0 %v484
        %v1877 = vpop.f32.mrf.mxu0
        %v1878 = vadd.f32 %v1789, %v1877
        %v1879 = vpop.f32.mrf.mxu0
        %v1880 = vadd.f32 %v1791, %v1879
        %1881 = vmatmul.bf16.gmra.mxu0 %v490
        %v1882 = vpop.f32.mrf.mxu0
        %v1883 = vadd.f32 %v1794, %v1882
        %v1884 = vpop.f32.mrf.mxu0
        %v1885 = vadd.f32 %v1796, %v1884
        %1886 = vmatmul.bf16.gmra.mxu0 %v496
        %v1887 = vpop.f32.mrf.mxu0
        %v1888 = vadd.f32 %v1799, %v1887
        %v1889 = vpop.f32.mrf.mxu0
        %v1890 = vadd.f32 %v1801, %v1889
        %1891 = vmatmul.bf16.gmra.mxu0 %v502
        %v1892 = vpop.f32.mrf.mxu0
        %v1893 = vadd.f32 %v1804, %v1892
        %v1894 = vpop.f32.mrf.mxu0
        %v1895 = vadd.f32 %v1806, %v1894
        %1896 = vmatmul.bf16.gmra.mxu0 %v508
        %v1897 = vpop.f32.mrf.mxu0
        %v1898 = vadd.f32 %v1809, %v1897
        %v1899 = vpop.f32.mrf.mxu0
        %v1900 = vadd.f32 %v1811, %v1899
        %1901 = vmatmul.bf16.gmra.mxu0 %v514
        %v1902 = vpop.f32.mrf.mxu0
        %v1903 = vadd.f32 %v1814, %v1902
        %v1904 = vpop.f32.mrf.mxu0
        %v1905 = vadd.f32 %v1816, %v1904
        %1906 = vmatmul.bf16.gmra.mxu0 %v520
        %v1907 = vpop.f32.mrf.mxu0
        %v1908 = vadd.f32 %v1819, %v1907
        %v1909 = vpop.f32.mrf.mxu0
        %v1910 = vadd.f32 %v1821, %v1909
        %1911 = vmatmul.bf16.gmra.mxu0 %v526
        %v1912 = vpop.f32.mrf.mxu0
        %v1913 = vadd.f32 %v1824, %v1912
        %v1914 = vpop.f32.mrf.mxu0
        %v1915 = vadd.f32 %v1826, %v1914
        %1916 = vmatmul.bf16.gmra.mxu0 %v532
        %v1917 = vpop.f32.mrf.mxu0
        %v1918 = vadd.f32 %v1829, %v1917
        %v1919 = vpop.f32.mrf.mxu0
        %v1920 = vadd.f32 %v1831, %v1919
        %1921 = vmatmul.bf16.gmra.mxu0 %v538
        %v1922 = vpop.f32.mrf.mxu0
        %v1923 = vadd.f32 %v1834, %v1922
        %v1924 = vpop.f32.mrf.mxu0
        %v1925 = vadd.f32 %v1836, %v1924
        %1926 = vmatmul.bf16.gmra.mxu0 %v544
        %v1927 = vpop.f32.mrf.mxu0
        %v1928 = vadd.f32 %v1839, %v1927
        %v1929 = vpop.f32.mrf.mxu0
        %v1930 = vadd.f32 %v1841, %v1929
        %1931 = vmatmul.bf16.gmra.mxu0 %v550
        %v1932 = vpop.f32.mrf.mxu0
        %v1933 = vadd.f32 %v1844, %v1932
        %v1934 = vpop.f32.mrf.mxu0
        %v1935 = vadd.f32 %v1846, %v1934
        %1936 = vdwg.mxu0
        %1937 = vmatpush.bf16.msra.mxu0 %v1007
        %1938 = vmatpush.bf16.msra.mxu0 %v1005
        %1939 = vmatpush.bf16.msra.mxu0 %v1003
        %1940 = vmatpush.bf16.msra.mxu0 %v1001
        %1941 = vmatpush.bf16.msra.mxu0 %v999
        %1942 = vmatpush.bf16.msra.mxu0 %v997
        %1943 = vmatpush.bf16.msra.mxu0 %v995
        %1944 = vmatpush.bf16.msra.mxu0 %v993
        %1945 = vmatmul.bf16.gmra.mxu0 %v461
        %v1946 = vpop.f32.mrf.mxu0
        %v1947 = vadd.f32 %v1858, %v1946
        %v1948 = vpop.f32.mrf.mxu0
        %v1949 = vadd.f32 %v1860, %v1948
        %1950 = vmatmul.bf16.gmra.mxu0 %v467
        %v1951 = vpop.f32.mrf.mxu0
        %v1952 = vadd.f32 %v1863, %v1951
        %v1953 = vpop.f32.mrf.mxu0
        %v1954 = vadd.f32 %v1865, %v1953
        %1955 = vmatmul.bf16.gmra.mxu0 %v473
        %v1956 = vpop.f32.mrf.mxu0
        %v1957 = vadd.f32 %v1868, %v1956
        %v1958 = vpop.f32.mrf.mxu0
        %v1959 = vadd.f32 %v1870, %v1958
        %1960 = vmatmul.bf16.gmra.mxu0 %v479
        %v1961 = vpop.f32.mrf.mxu0
        %v1962 = vadd.f32 %v1873, %v1961
        %v1963 = vpop.f32.mrf.mxu0
        %v1964 = vadd.f32 %v1875, %v1963
        %1965 = vmatmul.bf16.gmra.mxu0 %v485
        %v1966 = vpop.f32.mrf.mxu0
        %v1967 = vadd.f32 %v1878, %v1966
        %v1968 = vpop.f32.mrf.mxu0
        %v1969 = vadd.f32 %v1880, %v1968
        %1970 = vmatmul.bf16.gmra.mxu0 %v491
        %v1971 = vpop.f32.mrf.mxu0
        %v1972 = vadd.f32 %v1883, %v1971
        %v1973 = vpop.f32.mrf.mxu0
        %v1974 = vadd.f32 %v1885, %v1973
        %1975 = vmatmul.bf16.gmra.mxu0 %v497
        %v1976 = vpop.f32.mrf.mxu0
        %v1977 = vadd.f32 %v1888, %v1976
        %v1978 = vpop.f32.mrf.mxu0
        %v1979 = vadd.f32 %v1890, %v1978
        %1980 = vmatmul.bf16.gmra.mxu0 %v503
        %v1981 = vpop.f32.mrf.mxu0
        %v1982 = vadd.f32 %v1893, %v1981
        %v1983 = vpop.f32.mrf.mxu0
        %v1984 = vadd.f32 %v1895, %v1983
        %1985 = vmatmul.bf16.gmra.mxu0 %v509
        %v1986 = vpop.f32.mrf.mxu0
        %v1987 = vadd.f32 %v1898, %v1986
        %v1988 = vpop.f32.mrf.mxu0
        %v1989 = vadd.f32 %v1900, %v1988
        %1990 = vmatmul.bf16.gmra.mxu0 %v515
        %v1991 = vpop.f32.mrf.mxu0
        %v1992 = vadd.f32 %v1903, %v1991
        %v1993 = vpop.f32.mrf.mxu0
        %v1994 = vadd.f32 %v1905, %v1993
        %1995 = vmatmul.bf16.gmra.mxu0 %v521
        %v1996 = vpop.f32.mrf.mxu0
        %v1997 = vadd.f32 %v1908, %v1996
        %v1998 = vpop.f32.mrf.mxu0
        %v1999 = vadd.f32 %v1910, %v1998
        %2000 = vmatmul.bf16.gmra.mxu0 %v527
        %v2001 = vpop.f32.mrf.mxu0
        %v2002 = vadd.f32 %v1913, %v2001
        %v2003 = vpop.f32.mrf.mxu0
        %v2004 = vadd.f32 %v1915, %v2003
        %2005 = vmatmul.bf16.gmra.mxu0 %v533
        %v2006 = vpop.f32.mrf.mxu0
        %v2007 = vadd.f32 %v1918, %v2006
        %v2008 = vpop.f32.mrf.mxu0
        %v2009 = vadd.f32 %v1920, %v2008
        %2010 = vmatmul.bf16.gmra.mxu0 %v539
        %v2011 = vpop.f32.mrf.mxu0
        %v2012 = vadd.f32 %v1923, %v2011
        %v2013 = vpop.f32.mrf.mxu0
        %v2014 = vadd.f32 %v1925, %v2013
        %2015 = vmatmul.bf16.gmra.mxu0 %v545
        %v2016 = vpop.f32.mrf.mxu0
        %v2017 = vadd.f32 %v1928, %v2016
        %v2018 = vpop.f32.mrf.mxu0
        %v2019 = vadd.f32 %v1930, %v2018
        %2020 = vmatmul.bf16.gmra.mxu0 %v551
        %v2021 = vpop.f32.mrf.mxu0
        %v2022 = vadd.f32 %v1933, %v2021
        %v2023 = vpop.f32.mrf.mxu0
        %v2024 = vadd.f32 %v1935, %v2023
        %2025 = vdwg.mxu0
        %2026 = vmatpush.bf16.msra.mxu0 %v1023
        %2027 = vmatpush.bf16.msra.mxu0 %v1021
        %2028 = vmatpush.bf16.msra.mxu0 %v1019
        %2029 = vmatpush.bf16.msra.mxu0 %v1017
        %2030 = vmatpush.bf16.msra.mxu0 %v1015
        %2031 = vmatpush.bf16.msra.mxu0 %v1013
        %2032 = vmatpush.bf16.msra.mxu0 %v1011
        %2033 = vmatpush.bf16.msra.mxu0 %v1009
        %2034 = vmatmul.bf16.gmra.mxu0 %v462
        %v2035 = vpop.f32.mrf.mxu0
        %v2036 = vadd.f32 %v1947, %v2035
        %v2037 = vpop.f32.mrf.mxu0
        %v2038 = vadd.f32 %v1949, %v2037
        %2039 = vmatmul.bf16.gmra.mxu0 %v468
        %v2040 = vpop.f32.mrf.mxu0
        %v2041 = vadd.f32 %v1952, %v2040
        %v2042 = vpop.f32.mrf.mxu0
        %v2043 = vadd.f32 %v1954, %v2042
        %2044 = vmatmul.bf16.gmra.mxu0 %v474
        %v2045 = vpop.f32.mrf.mxu0
        %v2046 = vadd.f32 %v1957, %v2045
        %v2047 = vpop.f32.mrf.mxu0
        %v2048 = vadd.f32 %v1959, %v2047
        %2049 = vmatmul.bf16.gmra.mxu0 %v480
        %v2050 = vpop.f32.mrf.mxu0
        %v2051 = vadd.f32 %v1962, %v2050
        %v2052 = vpop.f32.mrf.mxu0
        %v2053 = vadd.f32 %v1964, %v2052
        %2054 = vmatmul.bf16.gmra.mxu0 %v486
        %v2055 = vpop.f32.mrf.mxu0
        %v2056 = vadd.f32 %v1967, %v2055
        %v2057 = vpop.f32.mrf.mxu0
        %v2058 = vadd.f32 %v1969, %v2057
        %2059 = vmatmul.bf16.gmra.mxu0 %v492
        %v2060 = vpop.f32.mrf.mxu0
        %v2061 = vadd.f32 %v1972, %v2060
        %v2062 = vpop.f32.mrf.mxu0
        %v2063 = vadd.f32 %v1974, %v2062
        %2064 = vmatmul.bf16.gmra.mxu0 %v498
        %v2065 = vpop.f32.mrf.mxu0
        %v2066 = vadd.f32 %v1977, %v2065
        %v2067 = vpop.f32.mrf.mxu0
        %v2068 = vadd.f32 %v1979, %v2067
        %2069 = vmatmul.bf16.gmra.mxu0 %v504
        %v2070 = vpop.f32.mrf.mxu0
        %v2071 = vadd.f32 %v1982, %v2070
        %v2072 = vpop.f32.mrf.mxu0
        %v2073 = vadd.f32 %v1984, %v2072
        %2074 = vmatmul.bf16.gmra.mxu0 %v510
        %v2075 = vpop.f32.mrf.mxu0
        %v2076 = vadd.f32 %v1987, %v2075
        %v2077 = vpop.f32.mrf.mxu0
        %v2078 = vadd.f32 %v1989, %v2077
        %2079 = vmatmul.bf16.gmra.mxu0 %v516
        %v2080 = vpop.f32.mrf.mxu0
        %v2081 = vadd.f32 %v1992, %v2080
        %v2082 = vpop.f32.mrf.mxu0
        %v2083 = vadd.f32 %v1994, %v2082
        %2084 = vmatmul.bf16.gmra.mxu0 %v522
        %v2085 = vpop.f32.mrf.mxu0
        %v2086 = vadd.f32 %v1997, %v2085
        %v2087 = vpop.f32.mrf.mxu0
        %v2088 = vadd.f32 %v1999, %v2087
        %2089 = vmatmul.bf16.gmra.mxu0 %v528
        %v2090 = vpop.f32.mrf.mxu0
        %v2091 = vadd.f32 %v2002, %v2090
        %v2092 = vpop.f32.mrf.mxu0
        %v2093 = vadd.f32 %v2004, %v2092
        %2094 = vmatmul.bf16.gmra.mxu0 %v534
        %v2095 = vpop.f32.mrf.mxu0
        %v2096 = vadd.f32 %v2007, %v2095
        %v2097 = vpop.f32.mrf.mxu0
        %v2098 = vadd.f32 %v2009, %v2097
        %2099 = vmatmul.bf16.gmra.mxu0 %v540
        %v2100 = vpop.f32.mrf.mxu0
        %v2101 = vadd.f32 %v2012, %v2100
        %v2102 = vpop.f32.mrf.mxu0
        %v2103 = vadd.f32 %v2014, %v2102
        %2104 = vmatmul.bf16.gmra.mxu0 %v546
        %v2105 = vpop.f32.mrf.mxu0
        %v2106 = vadd.f32 %v2017, %v2105
        %v2107 = vpop.f32.mrf.mxu0
        %v2108 = vadd.f32 %v2019, %v2107
        %2109 = vmatmul.bf16.gmra.mxu0 %v552
        %v2110 = vpop.f32.mrf.mxu0
        %v2111 = vadd.f32 %v2022, %v2110
        %v2112 = vpop.f32.mrf.mxu0
        %v2113 = vadd.f32 %v2024, %v2112
        %2114 = vdwg.mxu0
        %2115 = vmatpush.bf16.msra.mxu0 %v1039
        %2116 = vmatpush.bf16.msra.mxu0 %v1037
        %2117 = vmatpush.bf16.msra.mxu0 %v1035
        %2118 = vmatpush.bf16.msra.mxu0 %v1033
        %2119 = vmatpush.bf16.msra.mxu0 %v1031
        %2120 = vmatpush.bf16.msra.mxu0 %v1029
        %2121 = vmatpush.bf16.msra.mxu0 %v1027
        %2122 = vmatpush.bf16.msra.mxu0 %v1025
        %2123 = vmatmul.bf16.gmra.mxu0 %v463
        %v2124 = vpop.f32.mrf.mxu0
        %v2125 = vadd.f32 %v2036, %v2124
        %v2126 = vpop.f32.mrf.mxu0
        %v2127 = vadd.f32 %v2038, %v2126
        %2128 = vmatmul.bf16.gmra.mxu0 %v469
        %v2129 = vpop.f32.mrf.mxu0
        %v2130 = vadd.f32 %v2041, %v2129
        %v2131 = vpop.f32.mrf.mxu0
        %v2132 = vadd.f32 %v2043, %v2131
        %2133 = vmatmul.bf16.gmra.mxu0 %v475
        %v2134 = vpop.f32.mrf.mxu0
        %v2135 = vadd.f32 %v2046, %v2134
        %v2136 = vpop.f32.mrf.mxu0
        %v2137 = vadd.f32 %v2048, %v2136
        %2138 = vmatmul.bf16.gmra.mxu0 %v481
        %v2139 = vpop.f32.mrf.mxu0
        %v2140 = vadd.f32 %v2051, %v2139
        %v2141 = vpop.f32.mrf.mxu0
        %v2142 = vadd.f32 %v2053, %v2141
        %2143 = vmatmul.bf16.gmra.mxu0 %v487
        %v2144 = vpop.f32.mrf.mxu0
        %v2145 = vadd.f32 %v2056, %v2144
        %v2146 = vpop.f32.mrf.mxu0
        %v2147 = vadd.f32 %v2058, %v2146
        %2148 = vmatmul.bf16.gmra.mxu0 %v493
        %v2149 = vpop.f32.mrf.mxu0
        %v2150 = vadd.f32 %v2061, %v2149
        %v2151 = vpop.f32.mrf.mxu0
        %v2152 = vadd.f32 %v2063, %v2151
        %2153 = vmatmul.bf16.gmra.mxu0 %v499
        %v2154 = vpop.f32.mrf.mxu0
        %v2155 = vadd.f32 %v2066, %v2154
        %v2156 = vpop.f32.mrf.mxu0
        %v2157 = vadd.f32 %v2068, %v2156
        %2158 = vmatmul.bf16.gmra.mxu0 %v505
        %v2159 = vpop.f32.mrf.mxu0
        %v2160 = vadd.f32 %v2071, %v2159
        %v2161 = vpop.f32.mrf.mxu0
        %v2162 = vadd.f32 %v2073, %v2161
        %2163 = vmatmul.bf16.gmra.mxu0 %v511
        %v2164 = vpop.f32.mrf.mxu0
        %v2165 = vadd.f32 %v2076, %v2164
        %v2166 = vpop.f32.mrf.mxu0
        %v2167 = vadd.f32 %v2078, %v2166
        %2168 = vmatmul.bf16.gmra.mxu0 %v517
        %v2169 = vpop.f32.mrf.mxu0
        %v2170 = vadd.f32 %v2081, %v2169
        %v2171 = vpop.f32.mrf.mxu0
        %v2172 = vadd.f32 %v2083, %v2171
        %2173 = vmatmul.bf16.gmra.mxu0 %v523
        %v2174 = vpop.f32.mrf.mxu0
        %v2175 = vadd.f32 %v2086, %v2174
        %v2176 = vpop.f32.mrf.mxu0
        %v2177 = vadd.f32 %v2088, %v2176
        %2178 = vmatmul.bf16.gmra.mxu0 %v529
        %v2179 = vpop.f32.mrf.mxu0
        %v2180 = vadd.f32 %v2091, %v2179
        %v2181 = vpop.f32.mrf.mxu0
        %v2182 = vadd.f32 %v2093, %v2181
        %2183 = vmatmul.bf16.gmra.mxu0 %v535
        %v2184 = vpop.f32.mrf.mxu0
        %v2185 = vadd.f32 %v2096, %v2184
        %v2186 = vpop.f32.mrf.mxu0
        %v2187 = vadd.f32 %v2098, %v2186
        %2188 = vmatmul.bf16.gmra.mxu0 %v541
        %v2189 = vpop.f32.mrf.mxu0
        %v2190 = vadd.f32 %v2101, %v2189
        %v2191 = vpop.f32.mrf.mxu0
        %v2192 = vadd.f32 %v2103, %v2191
        %2193 = vmatmul.bf16.gmra.mxu0 %v547
        %v2194 = vpop.f32.mrf.mxu0
        %v2195 = vadd.f32 %v2106, %v2194
        %v2196 = vpop.f32.mrf.mxu0
        %v2197 = vadd.f32 %v2108, %v2196
        %2198 = vmatmul.bf16.gmra.mxu0 %v553
        %v2199 = vpop.f32.mrf.mxu0
        %v2200 = vadd.f32 %v2111, %v2199
        %v2201 = vpop.f32.mrf.mxu0
        %v2202 = vadd.f32 %v2113, %v2201
        %2203 = vdwg.mxu0
        %2204 = vst [vmem:[%s250] sm:$0xff] %v1591
        %2205 = vst [vmem:[%s250 + $0x8] sm:$0xff] %v2125
        %2206 = vst [vmem:[%s250 + $0x10] sm:$0xff] %v1593
        %2207 = vst [vmem:[%s250 + $0x18] sm:$0xff] %v2127
        %2208 = vst [vmem:[%s250 + $0x20] sm:$0xff] %v1596
        %2209 = vst [vmem:[%s250 + $0x28] sm:$0xff] %v2130
        %2210 = vst [vmem:[%s250 + $0x30] sm:$0xff] %v1598
        %2211 = vst [vmem:[%s250 + $0x38] sm:$0xff] %v2132
        %2212 = vst [vmem:[%s250 + $0x40] sm:$0xff] %v1601
        %2213 = vst [vmem:[%s250 + $0x48] sm:$0xff] %v2135
        %2214 = vst [vmem:[%s250 + $0x50] sm:$0xff] %v1603
        %2215 = vst [vmem:[%s250 + $0x58] sm:$0xff] %v2137
        %2216 = vst [vmem:[%s250 + $0x60] sm:$0xff] %v1606
        %2217 = vst [vmem:[%s250 + $0x68] sm:$0xff] %v2140
        %2218 = vst [vmem:[%s250 + $0x70] sm:$0xff] %v1608
        %2219 = vst [vmem:[%s250 + $0x78] sm:$0xff] %v2142
        %2220 = vst [vmem:[%s250 + $0x80] sm:$0xff] %v1611
        %2221 = vst [vmem:[%s250 + $0x88] sm:$0xff] %v2145
        %2222 = vst [vmem:[%s250 + $0x90] sm:$0xff] %v1613
        %2223 = vst [vmem:[%s250 + $0x98] sm:$0xff] %v2147
        %2224 = vst [vmem:[%s250 + $0xa0] sm:$0xff] %v1616
        %2225 = vst [vmem:[%s250 + $0xa8] sm:$0xff] %v2150
        %2226 = vst [vmem:[%s250 + $0xb0] sm:$0xff] %v1618
        %2227 = vst [vmem:[%s250 + $0xb8] sm:$0xff] %v2152
        %2228 = vst [vmem:[%s250 + $0xc0] sm:$0xff] %v1621
        %2229 = vst [vmem:[%s250 + $0xc8] sm:$0xff] %v2155
        %2230 = vst [vmem:[%s250 + $0xd0] sm:$0xff] %v1623
        %2231 = vst [vmem:[%s250 + $0xd8] sm:$0xff] %v2157
        %2232 = vst [vmem:[%s250 + $0xe0] sm:$0xff] %v1626
        %2233 = vst [vmem:[%s250 + $0xe8] sm:$0xff] %v2160
        %2234 = vst [vmem:[%s250 + $0xf0] sm:$0xff] %v1628
        %2235 = vst [vmem:[%s250 + $0xf8] sm:$0xff] %v2162
        %2236 = vst [vmem:[%s250 + $0x100] sm:$0xff] %v1631
        %2237 = vst [vmem:[%s250 + $0x108] sm:$0xff] %v2165
        %2238 = vst [vmem:[%s250 + $0x110] sm:$0xff] %v1633
        %2239 = vst [vmem:[%s250 + $0x118] sm:$0xff] %v2167
        %2240 = vst [vmem:[%s250 + $0x120] sm:$0xff] %v1636
        %2241 = vst [vmem:[%s250 + $0x128] sm:$0xff] %v2170
        %2242 = vst [vmem:[%s250 + $0x130] sm:$0xff] %v1638
        %2243 = vst [vmem:[%s250 + $0x138] sm:$0xff] %v2172
        %2244 = vst [vmem:[%s250 + $0x140] sm:$0xff] %v1641
        %2245 = vst [vmem:[%s250 + $0x148] sm:$0xff] %v2175
        %2246 = vst [vmem:[%s250 + $0x150] sm:$0xff] %v1643
        %2247 = vst [vmem:[%s250 + $0x158] sm:$0xff] %v2177
        %2248 = vst [vmem:[%s250 + $0x160] sm:$0xff] %v1646
        %2249 = vst [vmem:[%s250 + $0x168] sm:$0xff] %v2180
        %2250 = vst [vmem:[%s250 + $0x170] sm:$0xff] %v1648
        %2251 = vst [vmem:[%s250 + $0x178] sm:$0xff] %v2182
        %2252 = vst [vmem:[%s250 + $0x180] sm:$0xff] %v1651
        %2253 = vst [vmem:[%s250 + $0x188] sm:$0xff] %v2185
        %2254 = vst [vmem:[%s250 + $0x190] sm:$0xff] %v1653
        %2255 = vst [vmem:[%s250 + $0x198] sm:$0xff] %v2187
        %2256 = vst [vmem:[%s250 + $0x1a0] sm:$0xff] %v1656
        %2257 = vst [vmem:[%s250 + $0x1a8] sm:$0xff] %v2190
        %2258 = vst [vmem:[%s250 + $0x1b0] sm:$0xff] %v1658
        %2259 = vst [vmem:[%s250 + $0x1b8] sm:$0xff] %v2192
        %2260 = vst [vmem:[%s250 + $0x1c0] sm:$0xff] %v1661
        %2261 = vst [vmem:[%s250 + $0x1c8] sm:$0xff] %v2195
        %2262 = vst [vmem:[%s250 + $0x1d0] sm:$0xff] %v1663
        %2263 = vst [vmem:[%s250 + $0x1d8] sm:$0xff] %v2197
        %2264 = vst [vmem:[%s250 + $0x1e0] sm:$0xff] %v1666
        %2265 = vst [vmem:[%s250 + $0x1e8] sm:$0xff] %v2200
        %2266 = vst [vmem:[%s250 + $0x1f0] sm:$0xff] %v1668
        %2267 = vst [vmem:[%s250 + $0x1f8] sm:$0xff] %v2202
        %s2268 = sand.u32 %s121, 1
        %s2269 = scalar_lea.sflag [#allocation4], %s2268
        %s2270 = sand.u32 %s121, 1
        %s2271 = smul.addr %s2270, 512
        %s2272 = scalar_lea.vmem [#allocation7], %s2271
        // Predicated region
        $region41: #{linear_pallas.1} parent=31 // pred_check
          %p2273 = pneg %p131
        $region42: #{linear_pallas.1} parent=31 // pred_check_branch
          %2275 = sbr.rel (%p2273) target = $region44
        $region43: #{linear_pallas.1} parent=31 // pred_region
          %s2276 = smul.u32 32, %s25
          %s2277 = smul.u32 2, %s26
          %s2278 = ssub.s32 25, %s2276
          %s2279 = smul.u32 8, %s2278
          %s2280 = smul.u32 %s2279, 2
          %s2281 = ssub.s32 512, %s2280
          %s2282 = sshll.u32 %s2281, 4
          %2283 = vsyncadd %s2269, %s2282
          %p2284 = scmp.ne.s32.totalorder 0, %s2280
          %s2285 = smul.addr %s2276, 6
          %s2286 = sadd.s32 %s2277, %s2285
          %s2287 = smul.addr %s2286, 8
          %s2288 = scalar_lea.hbm %s3, %s2287
          %s2289 = smul.u32 16, %s2278
          %s2290 = sshll.u32 %s2272, 4
          %s2291 = int_to_ptr.vmem [resolvable:$true] %s2290
          %s2292 = sshll.u32 %s2288, 4
          %s2293 = int_to_ptr.hbm [resolvable:$true] %s2292
          %s2294 = sshll.u32 %s2289, 4
          %2298 = dma.vmem_to_hbm [thread:$0]  (%p2284), %s2291, %s2294, %s2293, %s2269, 256, 768, 16
        $region44: #{linear_pallas.1} parent=31 // pred_fallthru
          _
      $region32: #{linear_pallas.1} parent=5 // pred_fallthru
        _
      %p2299 = scmp.le.s32.totalorder 2, %s16
      // Predicated region
      $region45: #{linear_pallas.1} parent=5 // pred_check
        %p2300 = pneg %p2299
      $region46: #{linear_pallas.1} parent=5 // pred_check_branch
        %2302 = sbr.rel (%p2300) target = $region48
      $region47: #{linear_pallas.1} parent=5 // pred_region
        %s2303 = ssub.s32 %s16, 2
        // Predicated region
        $region49: #{linear_pallas.1} parent=47 // pred_check
          %p2304 = pneg %p137
        $region50: #{linear_pallas.1} parent=47 // pred_check_branch
          %2306 = sbr.rel (%p2304) target = $region52
        $region51: #{linear_pallas.1} parent=47 // pred_region
          %s2307 = sand.u32 %s122, 1
          %s2308 = scalar_lea.sflag [#allocation4], %s2307
          %s2309 = sand.u32 %s122, 1
          %s2310 = smul.addr %s2309, 512
          %s2311 = scalar_lea.vmem [#allocation7], %s2310
          %2313 = dma.done %s2308, 8192
        $region52: #{linear_pallas.1} parent=47 // pred_fallthru
          _
      $region48: #{linear_pallas.1} parent=5 // pred_fallthru
        _
    $region6: #{linear_pallas.1} parent=1 // loop_footer
      %s20 = sadd.s32 1, %s16
    $region7: #{linear_pallas.1} parent=1 // loop_footer_branch
      %15 = sbr.rel target = $region3
    $region8: #{linear_pallas.1} parent=1 // loop_exit
      _
    %2314 = vsyncpa [#allocation3], 1
    %s2315 = scalar_lea.sflag [#allocation3], 1
    %2316 = vsyncpa %s2315, 1
    %2317 = vsyncpa [#allocation6], 1
    %s2318 = scalar_lea.sflag [#allocation6], 1
    %2319 = vsyncpa %s2318, 1
    %2320 = vsyncpa [#allocation4], 1
    %s2321 = scalar_lea.sflag [#allocation4], 1
    %2322 = vsyncpa %s2321, 1

</llo_original>
